<compile_context>
chip_gen: v7x
topology: tpu7x:2x2x1
jax: 0.10.0
libtpu: 0.0.40
codegen_flags: <defaults>
</compile_context>

<pallas_src>
import functools
import math

import jax
import jax.numpy as jnp
import numpy as np
from jax import lax
from jax.experimental import pallas as pl
from jax.experimental.pallas import tpu as pltpu


def _round_up(x, m):
    return (x + m - 1) // m * m


# ----------------------------------------------------------------------------
# Fused Pallas kernel: conv0 + ReLU + conv1 + ReLU + freq-slice + flatten +
# affine for one batch element.  Everything is a 2-D MXU matmul on unit-stride
# slices; all stride-2 / window structure was pre-resolved in the wrapper.
# ----------------------------------------------------------------------------
def _fused_subsample_kernel(xph_ref, g_ref, h_ref, wa_ref,
                            b0_ref, b1_ref, ba_ref, out_ref, *, tk):
    """Shapes (per grid step = one batch element):
      xph_ref: (1, 4, Ha, Wp)      time-phase-split padded input (compute dtype)
      g_ref:   (3, Wp, W0c*32)     banded conv0 weights, one per time tap i
      h_ref:   (3, W0c*32, Dc*32)  banded conv1 weights, one per time tap i
      wa_ref:  (Dc*32, d_model)    affine weights (flatten permutation folded in)
      b0_ref:  (1, W0c*32) f32     conv0 bias tiled over kept freq columns
      b1_ref:  (1, Dc*32)  f32     conv1 bias tiled over kept freq columns
      ba_ref:  (1, d_model) f32    affine bias
      out_ref: (1, tk, d_model) f32
    """
    f32 = jnp.float32
    cdt = g_ref.dtype            # MXU operand dtype (bf16 or f32)
    re = tk + 1

    def dot(a, b):
        return jnp.dot(a, b, preferred_element_type=f32)

    # conv0 (stride (2,2)) -- even / odd output time rows.
    #   y0[2a]   reads input rows 4a+{0,1,2}   -> phases 0,1,2 at phase-row a
    #   y0[2a+1] reads input rows 4a+2+{0,1,2} -> phases 2,3 at a, phase 0 at a+1
    acc_e = dot(xph_ref[0, 0, 0:re, :], g_ref[0])
    acc_e += dot(xph_ref[0, 1, 0:re, :], g_ref[1])
    acc_e += dot(xph_ref[0, 2, 0:re, :], g_ref[2])
    y0e = jnp.maximum(acc_e + b0_ref[...], 0.0)          # (re, W0c*32) f32

    acc_o = dot(xph_ref[0, 2, 0:tk, :], g_ref[0])
    acc_o += dot(xph_ref[0, 3, 0:tk, :], g_ref[1])
    acc_o += dot(xph_ref[0, 0, 1:tk + 1, :], g_ref[2])
    y0o = jnp.maximum(acc_o + b0_ref[...], 0.0)          # (tk, W0c*32) f32

    # conv1 (stride (2,1)): y1[t] reads y0 rows {2t, 2t+1, 2t+2}
    #                        = y0e[t], y0o[t], y0e[t+1]
    y0e_c = y0e.astype(cdt)
    y0o_c = y0o.astype(cdt)
    acc1 = dot(y0e_c[0:tk, :], h_ref[0])
    acc1 += dot(y0o_c, h_ref[1])
    acc1 += dot(y0e_c[1:tk + 1, :], h_ref[2])
    y1 = jnp.maximum(acc1 + b1_ref[...], 0.0)            # (tk, Dc*32) f32

    # Affine projection (channel-major flatten already folded into wa).
    out = dot(y1.astype(cdt), wa_ref[...]) + ba_ref[...]
    out_ref[0] = out.astype(out_ref.dtype)


# ----------------------------------------------------------------------------
# Wrapper-side weight preprocessing (tiny, would normally be cached at init):
# banded matrices that absorb the 3-wide frequency windows of the convs.
# ----------------------------------------------------------------------------
def _build_banded_weights(conv0_w, conv1_w, wp, w0c, dc):
    # sel0[j, w, w0] = 1 iff w == 2*w0 + j  (conv0: freq stride 2, kernel 3)
    w_idx = np.arange(wp)
    w0_idx = np.arange(w0c)
    j_idx = np.arange(3)
    sel0 = (w_idx[None, :, None] ==
            2 * w0_idx[None, None, :] + j_idx[:, None, None])
    sel0 = jnp.asarray(sel0, jnp.float32)
    # G[i, w, w0, c] = sum_j sel0[j, w, w0] * conv0_w[i, j, 0, c]
    g = jnp.einsum('jab,ijc->iabc', sel0, conv0_w[:, :, 0, :])
    g = g.reshape(3, wp, w0c * 32)

    # sel1[j, w, w1] = 1 iff w == w1 + j    (conv1: freq stride 1, kernel 3)
    w_idx = np.arange(w0c)
    w1_idx = np.arange(dc)
    sel1 = (w_idx[None, :, None] == w1_idx[None, None, :] + j_idx[:, None, None])
    sel1 = jnp.asarray(sel1, jnp.float32)
    # H[i, w, c0, w1, c1] = sum_j sel1[j, w, w1] * conv1_w[i, j, c0, c1]
    h = jnp.einsum('jab,ijcd->iacbd', sel1, conv1_w)
    h = h.reshape(3, w0c * 32, dc * 32)
    return g, h


# ----------------------------------------------------------------------------
# Forward pass of Conv2dSubsample (fused, single pallas_call).
# ----------------------------------------------------------------------------
def conv2d_subsample_forward(feats, feat_lengths, params, *, d_input, d_model,
                             n_layers=2, pad='same',
                             compute_dtype=jnp.bfloat16):
    # TODO(synk): the fused kernel covers the module defaults (n_layers=2,
    # pad='same'); other configs would need extra phase levels / length logic.
    assert n_layers == 2, "fused kernel implements the n_layers=2 default"
    assert pad == 'same', "fused kernel implements the pad='same' default"

    B, T, D = feats.shape
    assert D == d_input
    dc = int(math.ceil(d_input / 2))       # d_conv_out
    tk = int(math.ceil(T / 4.0))           # kept time steps = ceil(ceil(T/2)/2)
    w0c = dc + 2                           # conv0 freq cols consumed by conv1
    ha = tk + 1                            # rows per time-phase plane
    hp = 4 * ha                            # padded time   (zeros, same semantics)
    wp = _round_up(2 * w0c + 1, 8)         # padded freq   (zeros, same semantics)

    # Zero padding + time-phase-4 split: xph[b, r, a, w] = x_pad[b, 4a + r, w].
    # The kept outputs only ever read rows/cols that are identical to the
    # reference F.pad(feats, (0, 10, 0, 20)) version, so semantics match.
    x_pad = jnp.pad(feats, ((0, 0), (0, hp - T), (0, wp - D)))
    xph = x_pad.reshape(B, ha, 4, wp).transpose(0, 2, 1, 3)   # (B, 4, Ha, Wp)

    g, h = _build_banded_weights(params['conv0_w'], params['conv1_w'],
                                 wp, w0c, dc)

    # Fold the channel-major flatten (permute(0,2,1,3).view(B,T,C*D)) into the
    # affine weight: kernel emits features in (freq, channel) order.
    wa = params['affine_w'].reshape(32, dc, d_model)
    wa = wa.transpose(1, 0, 2).reshape(dc * 32, d_model)

    b0t = jnp.tile(params['conv0_b'], w0c)[None, :].astype(jnp.float32)
    b1t = jnp.tile(params['conv1_b'], dc)[None, :].astype(jnp.float32)
    ba = params['affine_b'][None, :].astype(jnp.float32)

    xph = xph.astype(compute_dtype)
    g = g.astype(compute_dtype)
    h = h.astype(compute_dtype)
    wa = wa.astype(compute_dtype)

    out = pl.pallas_call(
        functools.partial(_fused_subsample_kernel, tk=tk),
        out_shape=jax.ShapeDtypeStruct((B, tk, d_model), jnp.float32),
        grid_spec=pltpu.PrefetchScalarGridSpec(
            num_scalar_prefetch=0,
            grid=(B,),
            in_specs=[
                pl.BlockSpec((1, 4, ha, wp), lambda b: (b, 0, 0, 0)),
                pl.BlockSpec((3, wp, w0c * 32), lambda b: (0, 0, 0)),
                pl.BlockSpec((3, w0c * 32, dc * 32), lambda b: (0, 0, 0)),
                pl.BlockSpec((dc * 32, d_model), lambda b: (0, 0)),
                pl.BlockSpec((1, w0c * 32), lambda b: (0, 0)),
                pl.BlockSpec((1, dc * 32), lambda b: (0, 0)),
                pl.BlockSpec((1, d_model), lambda b: (0, 0)),
            ],
            out_specs=pl.BlockSpec((1, tk, d_model), lambda b: (b, 0, 0)),
        ),
        compiler_params=pltpu.CompilerParams(
            dimension_semantics=("parallel",),
        ),
    )(xph, g, h, wa, b0t, b1t, ba)

    output_lengths = feat_lengths
    for _ in range(n_layers):
        output_lengths = jnp.ceil(output_lengths / 2.0).astype(jnp.int32)
    return out, output_lengths


# ----------------------------------------------------------------------------
# Pure-JAX reference (lax.conv) mirroring the PyTorch module exactly.
# ----------------------------------------------------------------------------
def reference_forward(feats, feat_lengths, params, *, d_input, d_model,
                      n_layers=2):
    B, T, D = feats.shape
    d_conv_out = int(math.ceil(d_input / 2))
    input_length = T
    feats = jnp.pad(feats, ((0, 0), (0, 20), (0, 10)))
    x = feats[..., None]
    strides = [(2, 2)] + [(2, 1)] * (n_layers - 1)
    for li in range(n_layers):
        w = params[f'conv{li}_w']
        b = params[f'conv{li}_b']
        dn = lax.conv_dimension_numbers(x.shape, w.shape,
                                        ('NHWC', 'HWIO', 'NHWC'))
        x = lax.conv_general_dilated(x, w, strides[li], 'VALID',
                                     dimension_numbers=dn)
        x = jnp.maximum(x + b, 0.0)
    x = x[:, :, :d_conv_out, :]
    Bc, Tc, Dc, C = x.shape
    x = jnp.transpose(x, (0, 1, 3, 2)).reshape(Bc, Tc, C * Dc)
    output_lengths = feat_lengths
    tensor_length = input_length
    for _ in range(n_layers):
        output_lengths = jnp.ceil(output_lengths / 2.0).astype(jnp.int32)
        tensor_length = int(math.ceil(tensor_length / 2.0))
    x = x[:, :tensor_length, :]
    out = x @ params['affine_w'] + params['affine_b']
    return out, output_lengths


# ----------------------------------------------------------------------------
# Deterministic parameter init + demo run.
# ----------------------------------------------------------------------------
def init_params(key, d_input, d_model, n_layers=2):
    d_conv_out = int(math.ceil(d_input / 2))
    params = {}
    ks = jax.random.split(key, 2 * n_layers + 2)
    cin = 1
    for li in range(n_layers):
        cout = 32
        fan_in = 3 * 3 * cin
        params[f'conv{li}_w'] = jax.random.normal(
            ks[2 * li], (3, 3, cin, cout), jnp.float32) / math.sqrt(fan_in)
        params[f'conv{li}_b'] = 0.01 * jax.random.normal(
            ks[2 * li + 1], (cout,), jnp.float32)
        cin = cout
    fan_in = 32 * d_conv_out
    params['affine_w'] = jax.random.normal(
        ks[-2], (fan_in, d_model), jnp.float32) / math.sqrt(fan_in)
    params['affine_b'] = 0.01 * jax.random.normal(
        ks[-1], (d_model,), jnp.float32)
    return params


if __name__ == "__main__":
    B, T, d_input, d_model, n_layers = 2, 48, 16, 32, 2

    key = jax.random.PRNGKey(0)
    k_feat, k_param = jax.random.split(key)
    feats = jax.random.normal(k_feat, (B, T, d_input), jnp.float32)
    feat_lengths = jnp.array([48, 31], dtype=jnp.int32)
    params = init_params(k_param, d_input, d_model, n_layers)

    ref_out, ref_lens = reference_forward(
        feats, feat_lengths, params,
        d_input=d_input, d_model=d_model, n_layers=n_layers)

    # f32 MXU operands: tight correctness check against the lax.conv reference.
    out_f32, lens_f32 = conv2d_subsample_forward(
        feats, feat_lengths, params, d_input=d_input, d_model=d_model,
        n_layers=n_layers, pad='same', compute_dtype=jnp.float32)
    out_f32 = jax.block_until_ready(out_f32)
    lens_f32 = jax.block_until_ready(lens_f32)
    assert out_f32.shape == ref_out.shape, (out_f32.shape, ref_out.shape)
    assert jnp.allclose(out_f32, ref_out, atol=1e-4, rtol=1e-4), (
        "f32 max abs err", float(jnp.max(jnp.abs(out_f32 - ref_out))))
    assert jnp.array_equal(lens_f32, ref_lens)

    # bf16 MXU operands (perf path): f32 accumulation; loose tolerance only
    # accounts for bf16 operand rounding (the f32 path above is the tight gate).
    out_bf16, lens_bf16 = conv2d_subsample_forward(
        feats, feat_lengths, params, d_input=d_input, d_model=d_model,
        n_layers=n_layers, pad='same', compute_dtype=jnp.bfloat16)
    out_bf16 = jax.block_until_ready(out_bf16)
    assert out_bf16.shape == ref_out.shape
    assert jnp.allclose(out_bf16, ref_out, atol=1e-1, rtol=1e-1), (
        "bf16 max abs err", float(jnp.max(jnp.abs(out_bf16 - ref_out))))
    assert jnp.array_equal(lens_bf16, ref_lens)

    print("KERNEL_OK")
</pallas_src>

<mosaic_0001>
module attributes {stable_mosaic.version = 11 : i64} {
  func.func @_fused_subsample_kernel(%arg0: i32, %arg1: memref<1x4x13x24xf32, #tpu.memory_space<vmem>>, %arg2: memref<3x24x320xf32, #tpu.memory_space<vmem>>, %arg3: memref<3x320x256xf32, #tpu.memory_space<vmem>>, %arg4: memref<256x32xf32, #tpu.memory_space<vmem>>, %arg5: memref<1x320xf32, #tpu.memory_space<vmem>>, %arg6: memref<1x256xf32, #tpu.memory_space<vmem>>, %arg7: memref<1x32xf32, #tpu.memory_space<vmem>>, %arg8: memref<1x12x32xf32, #tpu.memory_space<vmem>>) attributes {dimension_semantics = [#tpu.dimension_semantics<parallel>], iteration_bounds = array<i64: 2>, scalar_prefetch = 0 : i64, scratch_operands = 0 : i64, tpu.core_type = #tpu.core_type<tc>, window_params = [{transform_indices = @transform_0, window_bounds = array<i64: 1, 4, 13, 24>}, {pipeline_mode = #tpu.pipeline_mode<synchronous>, transform_indices = @transform_1, window_bounds = array<i64: 3, 24, 320>}, {pipeline_mode = #tpu.pipeline_mode<synchronous>, transform_indices = @transform_2, window_bounds = array<i64: 3, 320, 256>}, {pipeline_mode = #tpu.pipeline_mode<synchronous>, transform_indices = @transform_3, window_bounds = array<i64: 256, 32>}, {pipeline_mode = #tpu.pipeline_mode<synchronous>, transform_indices = @transform_4, window_bounds = array<i64: 1, 320>}, {pipeline_mode = #tpu.pipeline_mode<synchronous>, transform_indices = @transform_5, window_bounds = array<i64: 1, 256>}, {pipeline_mode = #tpu.pipeline_mode<synchronous>, transform_indices = @transform_6, window_bounds = array<i64: 1, 32>}, {transform_indices = @transform_7, window_bounds = array<i64: 1, 12, 32>}]} {
    %c0 = arith.constant 0 : index
    %c0_0 = arith.constant 0 : index
    %c0_1 = arith.constant 0 : index
    %c0_2 = arith.constant 0 : index
    %0 = vector.load %arg1[%c0, %c0_0, %c0_1, %c0_2] : memref<1x4x13x24xf32, #tpu.memory_space<vmem>>, vector<1x1x13x24xf32>
    %1 = vector.shape_cast %0 : vector<1x1x13x24xf32> to vector<13x24xf32>
    %c0_3 = arith.constant 0 : index
    %c0_4 = arith.constant 0 : index
    %c0_5 = arith.constant 0 : index
    %2 = vector.load %arg2[%c0_3, %c0_4, %c0_5] : memref<3x24x320xf32, #tpu.memory_space<vmem>>, vector<1x24x320xf32>
    %3 = vector.shape_cast %2 : vector<1x24x320xf32> to vector<24x320xf32>
    %cst = arith.constant dense<0.000000e+00> : vector<13x320xf32>
    %4 = tpu.matmul %1, %3, %cst {dimension_numbers = #tpu.dot_dimension_numbers<[1], [0], [0], [1], [0, 0, 1, 1], [], []>} : vector<13x24xf32>, vector<24x320xf32>, vector<13x320xf32> -> vector<13x320xf32>
    %c0_6 = arith.constant 0 : index
    %c1 = arith.constant 1 : index
    %c0_7 = arith.constant 0 : index
    %c0_8 = arith.constant 0 : index
    %5 = vector.load %arg1[%c0_6, %c1, %c0_7, %c0_8] : memref<1x4x13x24xf32, #tpu.memory_space<vmem>>, vector<1x1x13x24xf32>
    %6 = vector.shape_cast %5 : vector<1x1x13x24xf32> to vector<13x24xf32>
    %c1_9 = arith.constant 1 : index
    %c0_10 = arith.constant 0 : index
    %c0_11 = arith.constant 0 : index
    %7 = vector.load %arg2[%c1_9, %c0_10, %c0_11] : memref<3x24x320xf32, #tpu.memory_space<vmem>>, vector<1x24x320xf32>
    %8 = vector.shape_cast %7 : vector<1x24x320xf32> to vector<24x320xf32>
    %cst_12 = arith.constant dense<0.000000e+00> : vector<13x320xf32>
    %9 = tpu.matmul %6, %8, %cst_12 {dimension_numbers = #tpu.dot_dimension_numbers<[1], [0], [0], [1], [0, 0, 1, 1], [], []>} : vector<13x24xf32>, vector<24x320xf32>, vector<13x320xf32> -> vector<13x320xf32>
    %10 = arith.addf %4, %9 : vector<13x320xf32>
    %c0_13 = arith.constant 0 : index
    %c2 = arith.constant 2 : index
    %c0_14 = arith.constant 0 : index
    %c0_15 = arith.constant 0 : index
    %11 = vector.load %arg1[%c0_13, %c2, %c0_14, %c0_15] : memref<1x4x13x24xf32, #tpu.memory_space<vmem>>, vector<1x1x13x24xf32>
    %12 = vector.shape_cast %11 : vector<1x1x13x24xf32> to vector<13x24xf32>
    %c2_16 = arith.constant 2 : index
    %c0_17 = arith.constant 0 : index
    %c0_18 = arith.constant 0 : index
    %13 = vector.load %arg2[%c2_16, %c0_17, %c0_18] : memref<3x24x320xf32, #tpu.memory_space<vmem>>, vector<1x24x320xf32>
    %14 = vector.shape_cast %13 : vector<1x24x320xf32> to vector<24x320xf32>
    %cst_19 = arith.constant dense<0.000000e+00> : vector<13x320xf32>
    %15 = tpu.matmul %12, %14, %cst_19 {dimension_numbers = #tpu.dot_dimension_numbers<[1], [0], [0], [1], [0, 0, 1, 1], [], []>} : vector<13x24xf32>, vector<24x320xf32>, vector<13x320xf32> -> vector<13x320xf32>
    %16 = arith.addf %10, %15 : vector<13x320xf32>
    %c0_20 = arith.constant 0 : index
    %c0_21 = arith.constant 0 : index
    %17 = vector.load %arg5[%c0_20, %c0_21] : memref<1x320xf32, #tpu.memory_space<vmem>>, vector<1x320xf32>
    %18 = vector.broadcast %17 : vector<1x320xf32> to vector<13x320xf32>
    %19 = arith.addf %16, %18 : vector<13x320xf32>
    %cst_22 = arith.constant 0.000000e+00 : f32
    %20 = vector.broadcast %cst_22 : f32 to vector<13x320xf32>
    %21 = arith.maximumf %19, %20 : vector<13x320xf32>
    %c0_23 = arith.constant 0 : index
    %c2_24 = arith.constant 2 : index
    %c0_25 = arith.constant 0 : index
    %c0_26 = arith.constant 0 : index
    %22 = vector.load %arg1[%c0_23, %c2_24, %c0_25, %c0_26] : memref<1x4x13x24xf32, #tpu.memory_space<vmem>>, vector<1x1x12x24xf32>
    %23 = vector.shape_cast %22 : vector<1x1x12x24xf32> to vector<12x24xf32>
    %c0_27 = arith.constant 0 : index
    %c0_28 = arith.constant 0 : index
    %c0_29 = arith.constant 0 : index
    %24 = vector.load %arg2[%c0_27, %c0_28, %c0_29] : memref<3x24x320xf32, #tpu.memory_space<vmem>>, vector<1x24x320xf32>
    %25 = vector.shape_cast %24 : vector<1x24x320xf32> to vector<24x320xf32>
    %cst_30 = arith.constant dense<0.000000e+00> : vector<12x320xf32>
    %26 = tpu.matmul %23, %25, %cst_30 {dimension_numbers = #tpu.dot_dimension_numbers<[1], [0], [0], [1], [0, 0, 1, 1], [], []>} : vector<12x24xf32>, vector<24x320xf32>, vector<12x320xf32> -> vector<12x320xf32>
    %c0_31 = arith.constant 0 : index
    %c3 = arith.constant 3 : index
    %c0_32 = arith.constant 0 : index
    %c0_33 = arith.constant 0 : index
    %27 = vector.load %arg1[%c0_31, %c3, %c0_32, %c0_33] : memref<1x4x13x24xf32, #tpu.memory_space<vmem>>, vector<1x1x12x24xf32>
    %28 = vector.shape_cast %27 : vector<1x1x12x24xf32> to vector<12x24xf32>
    %c1_34 = arith.constant 1 : index
    %c0_35 = arith.constant 0 : index
    %c0_36 = arith.constant 0 : index
    %29 = vector.load %arg2[%c1_34, %c0_35, %c0_36] : memref<3x24x320xf32, #tpu.memory_space<vmem>>, vector<1x24x320xf32>
    %30 = vector.shape_cast %29 : vector<1x24x320xf32> to vector<24x320xf32>
    %cst_37 = arith.constant dense<0.000000e+00> : vector<12x320xf32>
    %31 = tpu.matmul %28, %30, %cst_37 {dimension_numbers = #tpu.dot_dimension_numbers<[1], [0], [0], [1], [0, 0, 1, 1], [], []>} : vector<12x24xf32>, vector<24x320xf32>, vector<12x320xf32> -> vector<12x320xf32>
    %32 = arith.addf %26, %31 : vector<12x320xf32>
    %c0_38 = arith.constant 0 : index
    %c0_39 = arith.constant 0 : index
    %c1_40 = arith.constant 1 : index
    %c0_41 = arith.constant 0 : index
    %33 = vector.load %arg1[%c0_38, %c0_39, %c1_40, %c0_41] : memref<1x4x13x24xf32, #tpu.memory_space<vmem>>, vector<1x1x12x24xf32>
    %34 = vector.shape_cast %33 : vector<1x1x12x24xf32> to vector<12x24xf32>
    %c2_42 = arith.constant 2 : index
    %c0_43 = arith.constant 0 : index
    %c0_44 = arith.constant 0 : index
    %35 = vector.load %arg2[%c2_42, %c0_43, %c0_44] : memref<3x24x320xf32, #tpu.memory_space<vmem>>, vector<1x24x320xf32>
    %36 = vector.shape_cast %35 : vector<1x24x320xf32> to vector<24x320xf32>
    %cst_45 = arith.constant dense<0.000000e+00> : vector<12x320xf32>
    %37 = tpu.matmul %34, %36, %cst_45 {dimension_numbers = #tpu.dot_dimension_numbers<[1], [0], [0], [1], [0, 0, 1, 1], [], []>} : vector<12x24xf32>, vector<24x320xf32>, vector<12x320xf32> -> vector<12x320xf32>
    %38 = arith.addf %32, %37 : vector<12x320xf32>
    %c0_46 = arith.constant 0 : index
    %c0_47 = arith.constant 0 : index
    %39 = vector.load %arg5[%c0_46, %c0_47] : memref<1x320xf32, #tpu.memory_space<vmem>>, vector<1x320xf32>
    %40 = vector.broadcast %39 : vector<1x320xf32> to vector<12x320xf32>
    %41 = arith.addf %38, %40 : vector<12x320xf32>
    %cst_48 = arith.constant 0.000000e+00 : f32
    %42 = vector.broadcast %cst_48 : f32 to vector<12x320xf32>
    %43 = arith.maximumf %41, %42 : vector<12x320xf32>
    %44 = vector.extract_strided_slice %21 {offsets = [0, 0], sizes = [12, 320], strides = [1, 1]} : vector<13x320xf32> to vector<12x320xf32>
    %c0_49 = arith.constant 0 : index
    %c0_50 = arith.constant 0 : index
    %c0_51 = arith.constant 0 : index
    %45 = vector.load %arg3[%c0_49, %c0_50, %c0_51] : memref<3x320x256xf32, #tpu.memory_space<vmem>>, vector<1x320x256xf32>
    %46 = vector.shape_cast %45 : vector<1x320x256xf32> to vector<320x256xf32>
    %cst_52 = arith.constant dense<0.000000e+00> : vector<12x256xf32>
    %47 = tpu.matmul %44, %46, %cst_52 {dimension_numbers = #tpu.dot_dimension_numbers<[1], [0], [0], [1], [0, 0, 1, 1], [], []>} : vector<12x320xf32>, vector<320x256xf32>, vector<12x256xf32> -> vector<12x256xf32>
    %c1_53 = arith.constant 1 : index
    %c0_54 = arith.constant 0 : index
    %c0_55 = arith.constant 0 : index
    %48 = vector.load %arg3[%c1_53, %c0_54, %c0_55] : memref<3x320x256xf32, #tpu.memory_space<vmem>>, vector<1x320x256xf32>
    %49 = vector.shape_cast %48 : vector<1x320x256xf32> to vector<320x256xf32>
    %cst_56 = arith.constant dense<0.000000e+00> : vector<12x256xf32>
    %50 = tpu.matmul %43, %49, %cst_56 {dimension_numbers = #tpu.dot_dimension_numbers<[1], [0], [0], [1], [0, 0, 1, 1], [], []>} : vector<12x320xf32>, vector<320x256xf32>, vector<12x256xf32> -> vector<12x256xf32>
    %51 = arith.addf %47, %50 : vector<12x256xf32>
    %52 = vector.extract_strided_slice %21 {offsets = [1, 0], sizes = [12, 320], strides = [1, 1]} : vector<13x320xf32> to vector<12x320xf32>
    %c2_57 = arith.constant 2 : index
    %c0_58 = arith.constant 0 : index
    %c0_59 = arith.constant 0 : index
    %53 = vector.load %arg3[%c2_57, %c0_58, %c0_59] : memref<3x320x256xf32, #tpu.memory_space<vmem>>, vector<1x320x256xf32>
    %54 = vector.shape_cast %53 : vector<1x320x256xf32> to vector<320x256xf32>
    %cst_60 = arith.constant dense<0.000000e+00> : vector<12x256xf32>
    %55 = tpu.matmul %52, %54, %cst_60 {dimension_numbers = #tpu.dot_dimension_numbers<[1], [0], [0], [1], [0, 0, 1, 1], [], []>} : vector<12x320xf32>, vector<320x256xf32>, vector<12x256xf32> -> vector<12x256xf32>
    %56 = arith.addf %51, %55 : vector<12x256xf32>
    %c0_61 = arith.constant 0 : index
    %c0_62 = arith.constant 0 : index
    %57 = vector.load %arg6[%c0_61, %c0_62] : memref<1x256xf32, #tpu.memory_space<vmem>>, vector<1x256xf32>
    %58 = vector.broadcast %57 : vector<1x256xf32> to vector<12x256xf32>
    %59 = arith.addf %56, %58 : vector<12x256xf32>
    %cst_63 = arith.constant 0.000000e+00 : f32
    %60 = vector.broadcast %cst_63 : f32 to vector<12x256xf32>
    %61 = arith.maximumf %59, %60 : vector<12x256xf32>
    %c0_64 = arith.constant 0 : index
    %c0_65 = arith.constant 0 : index
    %62 = vector.load %arg4[%c0_64, %c0_65] : memref<256x32xf32, #tpu.memory_space<vmem>>, vector<256x32xf32>
    %cst_66 = arith.constant dense<0.000000e+00> : vector<12x32xf32>
    %63 = tpu.matmul %61, %62, %cst_66 {dimension_numbers = #tpu.dot_dimension_numbers<[1], [0], [0], [1], [0, 0, 1, 1], [], []>} : vector<12x256xf32>, vector<256x32xf32>, vector<12x32xf32> -> vector<12x32xf32>
    %c0_67 = arith.constant 0 : index
    %c0_68 = arith.constant 0 : index
    %64 = vector.load %arg7[%c0_67, %c0_68] : memref<1x32xf32, #tpu.memory_space<vmem>>, vector<1x32xf32>
    %65 = vector.broadcast %64 : vector<1x32xf32> to vector<12x32xf32>
    %66 = arith.addf %63, %65 : vector<12x32xf32>
    %c0_69 = arith.constant 0 : index
    %c0_70 = arith.constant 0 : index
    %c0_71 = arith.constant 0 : index
    %67 = vector.load %arg8[%c0_69, %c0_70, %c0_71] : memref<1x12x32xf32, #tpu.memory_space<vmem>>, vector<1x12x32xf32>
    %68 = vector.shape_cast %67 : vector<1x12x32xf32> to vector<12x32xf32>
    %69 = vector.shape_cast %66 : vector<12x32xf32> to vector<1x12x32xf32>
    tpu.vector_store %arg8[%c0_69, %c0_70, %c0_71], %69 {strides = array<i32>} : memref<1x12x32xf32, #tpu.memory_space<vmem>>, vector<1x12x32xf32>,
    return
  }
  func.func @transform_0(%arg0: i32) -> (i32, i32, i32, i32) {
    %c0_i32 = arith.constant 0 : i32
    %c0_i32_0 = arith.constant 0 : i32
    %c0_i32_1 = arith.constant 0 : i32
    %c0_i32_2 = arith.constant 0 : i32
    return %arg0, %c0_i32, %c0_i32_0, %c0_i32_1 : i32, i32, i32, i32
  }
  func.func @transform_1(%arg0: i32) -> (i32, i32, i32) {
    %c0_i32 = arith.constant 0 : i32
    %c0_i32_0 = arith.constant 0 : i32
    %c0_i32_1 = arith.constant 0 : i32
    %c0_i32_2 = arith.constant 0 : i32
    return %c0_i32, %c0_i32_0, %c0_i32_1 : i32, i32, i32
  }
  func.func @transform_2(%arg0: i32) -> (i32, i32, i32) {
    %c0_i32 = arith.constant 0 : i32
    %c0_i32_0 = arith.constant 0 : i32
    %c0_i32_1 = arith.constant 0 : i32
    %c0_i32_2 = arith.constant 0 : i32
    return %c0_i32, %c0_i32_0, %c0_i32_1 : i32, i32, i32
  }
  func.func @transform_3(%arg0: i32) -> (i32, i32) {
    %c0_i32 = arith.constant 0 : i32
    %c0_i32_0 = arith.constant 0 : i32
    %c0_i32_1 = arith.constant 0 : i32
    return %c0_i32, %c0_i32_0 : i32, i32
  }
  func.func @transform_4(%arg0: i32) -> (i32, i32) {
    %c0_i32 = arith.constant 0 : i32
    %c0_i32_0 = arith.constant 0 : i32
    %c0_i32_1 = arith.constant 0 : i32
    return %c0_i32, %c0_i32_0 : i32, i32
  }
  func.func @transform_5(%arg0: i32) -> (i32, i32) {
    %c0_i32 = arith.constant 0 : i32
    %c0_i32_0 = arith.constant 0 : i32
    %c0_i32_1 = arith.constant 0 : i32
    return %c0_i32, %c0_i32_0 : i32, i32
  }
  func.func @transform_6(%arg0: i32) -> (i32, i32) {
    %c0_i32 = arith.constant 0 : i32
    %c0_i32_0 = arith.constant 0 : i32
    %c0_i32_1 = arith.constant 0 : i32
    return %c0_i32, %c0_i32_0 : i32, i32
  }
  func.func @transform_7(%arg0: i32) -> (i32, i32, i32) {
    %c0_i32 = arith.constant 0 : i32
    %c0_i32_0 = arith.constant 0 : i32
    %c0_i32_1 = arith.constant 0 : i32
    return %arg0, %c0_i32, %c0_i32_0 : i32, i32, i32
  }
}

</mosaic_0001>

<llo_original>
// kernel: tpu_custom_call.1
$region0: #{tpu_custom_call.1}
  #allocation0 [shape = 'u32[]', space=smem, size = 0x4, offset = 0x4, fixed_abs, tag = 'smem constant byte address 0x4 - core index']
  #allocation1 [shape = 'u32[144,128]{1,0:T(1,128)}', space=vmem, size = 0x12000, scoped, tag = 'internal scratch']
  %s0 = inlined_call_operand.vmem [shape: f32[2,4,13,24], index: 0, kind: input, shape index: {}]
  %s1 = inlined_call_operand.vmem [shape: f32[3,24,320], index: 1, kind: input, shape index: {}]
  %s2 = inlined_call_operand.hbm [shape: f32[3,320,256], index: 2, kind: input, shape index: {}]
  %s3 = inlined_call_operand.vmem [shape: f32[256,32], index: 3, kind: input, shape index: {}]
  %s4 = inlined_call_operand.vmem [shape: f32[1,320], index: 4, kind: input, shape index: {}]
  %s5 = inlined_call_operand.vmem [shape: f32[1,256], index: 5, kind: input, shape index: {}]
  %s6 = inlined_call_operand.vmem [shape: f32[1,32], index: 6, kind: input, shape index: {}]
  %s7 = inlined_call_operand.vmem [shape: f32[2,12,32], index: 7, kind: output, shape index: {}]
  %s8 = sld [smem:[#allocation0]]
  $region65: #{tpu_custom_call.1} parent=0
    _
  %s10 = ssub.s32 1, %s8
  %s11 = scalar_select 0, %s10, %s8
  $region1: #{tpu_custom_call.1} parent=0
    #allocation2 [shape = 'u8[983040]{0}', space=vmem, size = 0xf0000, scoped, tag = 'input window, operand 2, single buffered']
    #allocation3 [shape = 's32[2]{0}', space=sflag, size = 0x8, scoped, tag = 'scoped memory for tpu_custom_call.1']
    %12 = vsyncpa [#allocation3], 0
    loop: start=0, step=1, limit=4
    $region2: #{tpu_custom_call.1} parent=1 // loop_pre_header
      _
    $region3: #{tpu_custom_call.1} parent=1 // loop_header
      %s14 = sphi 0, %s18
      %p15 = scmp.ge.s32.totalorder %s14, 4
      %s24 = sphi 0, %s26
      %s27 = sphi 0, %s24
      %s28 = sphi 0, %s27
      %s44 = sphi 0, %s28
      %s48 = sphi 0, %s48
      %s50 = sphi 0, %s48
      %s51 = sphi 0, %s50
      %s65 = sphi 0, %s51
      %s69 = sphi 0, %s69
      %s71 = sphi 0, %s69
      %s72 = sphi 0, %s71
      %s86 = sphi 0, %s72
      %s90 = sphi 0, %s90
      %s92 = sphi 0, %s90
      %s93 = sphi 0, %s92
      %s107 = sphi 0, %s93
      %s111 = sphi 0, %s111
      %s113 = sphi 0, %s111
      %s114 = sphi 0, %s113
      %s128 = sphi 0, %s114
      %s132 = sphi 0, %s132
      %s134 = sphi 0, %s132
      %s135 = sphi 0, %s134
      %s149 = sphi 0, %s135
      %s153 = sphi 0, %s153
      %s155 = sphi 0, %s153
      %s156 = sphi 0, %s155
      %s170 = sphi 0, %s156
      %s176 = sphi 0, %s178
      %s179 = sphi 0, %s176
      %s180 = sphi 0, %s179
      %s196 = sphi 0, %s180
    $region4: #{tpu_custom_call.1} parent=1 // loop_header_branch
      %17 = sbr.rel (%p15) target = $region8
    $region5: #{tpu_custom_call.1} parent=1 // loop_body
      %s19 = ssub.s32 %s14, 1
      %s20 = ssub.s32 %s14, 2
      %s21 = sadd.s32 %s14, 1
      %s22 = ssub.s32 %s14, %s21
      %p23 = scmp.eq.s32.totalorder %s22, 0
      %s25 = sadd.s32 %s24, 1
      %s26 = scalar_select %p23, %s24, %s25
      %p29 = pneg %p23
      %p30 = scmp.eq.s32.totalorder %s14, 1
      %p31 = por %p29, %p30
      %p32 = scmp.ne.s32.totalorder %s24, %s27
      %p33 = scmp.eq.s32.totalorder %s14, 0
      %p34 = por %p32, %p33
      %p35 = scmp.ne.s32.totalorder %s24, %s27
      %p36 = scmp.eq.s32.totalorder %s19, 1
      %p37 = por %p35, %p36
      %p38 = scmp.ne.s32.totalorder %s27, %s28
      %p39 = scmp.eq.s32.totalorder %s19, 0
      %p40 = por %p38, %p39
      %p41 = scmp.ne.s32.totalorder %s27, %s28
      %p42 = scmp.eq.s32.totalorder %s20, 1
      %p43 = por %p41, %p42
      %p45 = scmp.ne.s32.totalorder %s28, %s44
      %p46 = scmp.eq.s32.totalorder %s20, 0
      %p47 = por %p45, %p46
      %s49 = sadd.s32 %s48, 1
      %p52 = scmp.eq.s32.totalorder %s14, 1
      %p53 = scmp.ne.s32.totalorder %s48, %s50
      %p54 = scmp.eq.s32.totalorder %s14, 0
      %p55 = por %p53, %p54
      %p56 = scmp.ne.s32.totalorder %s48, %s50
      %p57 = scmp.eq.s32.totalorder %s19, 1
      %p58 = por %p56, %p57
      %p59 = scmp.ne.s32.totalorder %s50, %s51
      %p60 = scmp.eq.s32.totalorder %s19, 0
      %p61 = por %p59, %p60
      %p62 = scmp.ne.s32.totalorder %s50, %s51
      %p63 = scmp.eq.s32.totalorder %s20, 1
      %p64 = por %p62, %p63
      %p66 = scmp.ne.s32.totalorder %s51, %s65
      %p67 = scmp.eq.s32.totalorder %s20, 0
      %p68 = por %p66, %p67
      %s70 = sadd.s32 %s69, 1
      %p73 = scmp.eq.s32.totalorder %s14, 1
      %p74 = scmp.ne.s32.totalorder %s69, %s71
      %p75 = scmp.eq.s32.totalorder %s14, 0
      %p76 = por %p74, %p75
      %p77 = scmp.ne.s32.totalorder %s69, %s71
      %p78 = scmp.eq.s32.totalorder %s19, 1
      %p79 = por %p77, %p78
      %p80 = scmp.ne.s32.totalorder %s71, %s72
      %p81 = scmp.eq.s32.totalorder %s19, 0
      %p82 = por %p80, %p81
      %p83 = scmp.ne.s32.totalorder %s71, %s72
      %p84 = scmp.eq.s32.totalorder %s20, 1
      %p85 = por %p83, %p84
      %p87 = scmp.ne.s32.totalorder %s72, %s86
      %p88 = scmp.eq.s32.totalorder %s20, 0
      %p89 = por %p87, %p88
      %s91 = sadd.s32 %s90, 1
      %p94 = scmp.eq.s32.totalorder %s14, 1
      %p95 = scmp.ne.s32.totalorder %s90, %s92
      %p96 = scmp.eq.s32.totalorder %s14, 0
      %p97 = por %p95, %p96
      %p98 = scmp.ne.s32.totalorder %s90, %s92
      %p99 = scmp.eq.s32.totalorder %s19, 1
      %p100 = por %p98, %p99
      %p101 = scmp.ne.s32.totalorder %s92, %s93
      %p102 = scmp.eq.s32.totalorder %s19, 0
      %p103 = por %p101, %p102
      %p104 = scmp.ne.s32.totalorder %s92, %s93
      %p105 = scmp.eq.s32.totalorder %s20, 1
      %p106 = por %p104, %p105
      %p108 = scmp.ne.s32.totalorder %s93, %s107
      %p109 = scmp.eq.s32.totalorder %s20, 0
      %p110 = por %p108, %p109
      %s112 = sadd.s32 %s111, 1
      %p115 = scmp.eq.s32.totalorder %s14, 1
      %p116 = scmp.ne.s32.totalorder %s111, %s113
      %p117 = scmp.eq.s32.totalorder %s14, 0
      %p118 = por %p116, %p117
      %p119 = scmp.ne.s32.totalorder %s111, %s113
      %p120 = scmp.eq.s32.totalorder %s19, 1
      %p121 = por %p119, %p120
      %p122 = scmp.ne.s32.totalorder %s113, %s114
      %p123 = scmp.eq.s32.totalorder %s19, 0
      %p124 = por %p122, %p123
      %p125 = scmp.ne.s32.totalorder %s113, %s114
      %p126 = scmp.eq.s32.totalorder %s20, 1
      %p127 = por %p125, %p126
      %p129 = scmp.ne.s32.totalorder %s114, %s128
      %p130 = scmp.eq.s32.totalorder %s20, 0
      %p131 = por %p129, %p130
      %s133 = sadd.s32 %s132, 1
      %p136 = scmp.eq.s32.totalorder %s14, 1
      %p137 = scmp.ne.s32.totalorder %s132, %s134
      %p138 = scmp.eq.s32.totalorder %s14, 0
      %p139 = por %p137, %p138
      %p140 = scmp.ne.s32.totalorder %s132, %s134
      %p141 = scmp.eq.s32.totalorder %s19, 1
      %p142 = por %p140, %p141
      %p143 = scmp.ne.s32.totalorder %s134, %s135
      %p144 = scmp.eq.s32.totalorder %s19, 0
      %p145 = por %p143, %p144
      %p146 = scmp.ne.s32.totalorder %s134, %s135
      %p147 = scmp.eq.s32.totalorder %s20, 1
      %p148 = por %p146, %p147
      %p150 = scmp.ne.s32.totalorder %s135, %s149
      %p151 = scmp.eq.s32.totalorder %s20, 0
      %p152 = por %p150, %p151
      %s154 = sadd.s32 %s153, 1
      %p157 = scmp.eq.s32.totalorder %s14, 1
      %p158 = scmp.ne.s32.totalorder %s153, %s155
      %p159 = scmp.eq.s32.totalorder %s14, 0
      %p160 = por %p158, %p159
      %p161 = scmp.ne.s32.totalorder %s153, %s155
      %p162 = scmp.eq.s32.totalorder %s19, 1
      %p163 = por %p161, %p162
      %p164 = scmp.ne.s32.totalorder %s155, %s156
      %p165 = scmp.eq.s32.totalorder %s19, 0
      %p166 = por %p164, %p165
      %p167 = scmp.ne.s32.totalorder %s155, %s156
      %p168 = scmp.eq.s32.totalorder %s20, 1
      %p169 = por %p167, %p168
      %p171 = scmp.ne.s32.totalorder %s156, %s170
      %p172 = scmp.eq.s32.totalorder %s20, 0
      %p173 = por %p171, %p172
      %s174 = ssub.s32 %s14, %s21
      %p175 = scmp.eq.s32.totalorder %s174, 0
      %s177 = sadd.s32 %s176, 1
      %s178 = scalar_select %p175, %s176, %s177
      %p181 = pneg %p175
      %p182 = scmp.eq.s32.totalorder %s14, 1
      %p183 = por %p181, %p182
      %p184 = scmp.ne.s32.totalorder %s176, %s179
      %p185 = scmp.eq.s32.totalorder %s14, 0
      %p186 = por %p184, %p185
      %p187 = scmp.ne.s32.totalorder %s176, %s179
      %p188 = scmp.eq.s32.totalorder %s19, 1
      %p189 = por %p187, %p188
      %p190 = scmp.ne.s32.totalorder %s179, %s180
      %p191 = scmp.eq.s32.totalorder %s19, 0
      %p192 = por %p190, %p191
      %p193 = scmp.ne.s32.totalorder %s179, %s180
      %p194 = scmp.eq.s32.totalorder %s20, 1
      %p195 = por %p193, %p194
      %p197 = scmp.ne.s32.totalorder %s180, %s196
      %p198 = scmp.eq.s32.totalorder %s20, 0
      %p199 = por %p197, %p198
      %p200 = scmp.le.s32.totalorder 1, %s14
      %p201 = scmp.lt.s32.totalorder %s14, 3
      %p202 = pnand %p200, %p201
      %p203 = pneg %p202
      // Predicated region
      $region9: #{tpu_custom_call.1} parent=5 // pred_check
        _
      $region10: #{tpu_custom_call.1} parent=5 // pred_check_branch
        %205 = sbr.rel (%p202) target = $region12
      $region11: #{tpu_custom_call.1} parent=5 // pred_region
        %s206 = ssub.s32 %s14, 1
        // Predicated region
        $region13: #{tpu_custom_call.1} parent=11 // pred_check
          %p207 = pneg %p61
        $region14: #{tpu_custom_call.1} parent=11 // pred_check_branch
          %209 = sbr.rel (%p207) target = $region16
        $region15: #{tpu_custom_call.1} parent=11 // pred_region
          _
        $region16: #{tpu_custom_call.1} parent=11 // pred_fallthru
          _
        // Predicated region
        $region17: #{tpu_custom_call.1} parent=11 // pred_check
          %p210 = pneg %p82
        $region18: #{tpu_custom_call.1} parent=11 // pred_check_branch
          %212 = sbr.rel (%p210) target = $region20
        $region19: #{tpu_custom_call.1} parent=11 // pred_region
          %s214 = ssub.s32 30720, 30720
          %215 = vsyncadd [#allocation3], %s214
          %s216 = sshll.u32 [#allocation2], 4
          %s217 = int_to_ptr.vmem [resolvable:$true] %s216
          %222 = dma.hbm_to_vmem [thread:$0]  %s2, 30720, %s217, [#allocation3], 256, 256, 16
        $region20: #{tpu_custom_call.1} parent=11 // pred_fallthru
          _
        // Predicated region
        $region21: #{tpu_custom_call.1} parent=11 // pred_check
          %p223 = pneg %p103
        $region22: #{tpu_custom_call.1} parent=11 // pred_check_branch
          %225 = sbr.rel (%p223) target = $region24
        $region23: #{tpu_custom_call.1} parent=11 // pred_region
          _
        $region24: #{tpu_custom_call.1} parent=11 // pred_fallthru
          _
        // Predicated region
        $region25: #{tpu_custom_call.1} parent=11 // pred_check
          %p226 = pneg %p124
        $region26: #{tpu_custom_call.1} parent=11 // pred_check_branch
          %228 = sbr.rel (%p226) target = $region28
        $region27: #{tpu_custom_call.1} parent=11 // pred_region
          _
        $region28: #{tpu_custom_call.1} parent=11 // pred_fallthru
          _
        // Predicated region
        $region29: #{tpu_custom_call.1} parent=11 // pred_check
          %p229 = pneg %p145
        $region30: #{tpu_custom_call.1} parent=11 // pred_check_branch
          %231 = sbr.rel (%p229) target = $region32
        $region31: #{tpu_custom_call.1} parent=11 // pred_region
          _
        $region32: #{tpu_custom_call.1} parent=11 // pred_fallthru
          _
        // Predicated region
        $region33: #{tpu_custom_call.1} parent=11 // pred_check
          %p232 = pneg %p166
        $region34: #{tpu_custom_call.1} parent=11 // pred_check_branch
          %234 = sbr.rel (%p232) target = $region36
        $region35: #{tpu_custom_call.1} parent=11 // pred_region
          _
        $region36: #{tpu_custom_call.1} parent=11 // pred_fallthru
          _
      $region12: #{tpu_custom_call.1} parent=5 // pred_fallthru
        _
      %p235 = scmp.lt.s32.totalorder %s14, 2
      // Predicated region
      $region37: #{tpu_custom_call.1} parent=5 // pred_check
        %p236 = pneg %p235
      $region38: #{tpu_custom_call.1} parent=5 // pred_check_branch
        %238 = sbr.rel (%p236) target = $region40
      $region39: #{tpu_custom_call.1} parent=5 // pred_region
        // Predicated region
        $region41: #{tpu_custom_call.1} parent=39 // pred_check
          %p239 = pneg %p34
        $region42: #{tpu_custom_call.1} parent=39 // pred_check_branch
          %241 = sbr.rel (%p239) target = $region44
        $region43: #{tpu_custom_call.1} parent=39 // pred_region
          %p242 = scmp.lt.s32.totalorder %s14, 1
          %s243 = scalar_select %p242, %s14, 1
          %s244 = smul.addr %s243, 8
          %s245 = smul.addr %s244, 8
          %s246 = scalar_lea.vmem %s0, %s245
        $region44: #{tpu_custom_call.1} parent=39 // pred_fallthru
          _
      $region40: #{tpu_custom_call.1} parent=5 // pred_fallthru
        _
      %p247 = scmp.le.s32.totalorder 1, %s14
      %p248 = scmp.lt.s32.totalorder %s14, 3
      %p249 = pnand %p247, %p248
      %p250 = pneg %p249
      // Predicated region
      $region45: #{tpu_custom_call.1} parent=5 // pred_check
        _
      $region46: #{tpu_custom_call.1} parent=5 // pred_check_branch
        %252 = sbr.rel (%p249) target = $region48
      $region47: #{tpu_custom_call.1} parent=5 // pred_region
        %s253 = ssub.s32 %s14, 1
        // Predicated region
        $region49: #{tpu_custom_call.1} parent=47 // pred_check
          %p254 = pneg %p82
        $region50: #{tpu_custom_call.1} parent=47 // pred_check_branch
          %256 = sbr.rel (%p254) target = $region52
        $region51: #{tpu_custom_call.1} parent=47 // pred_region
          %257 = dma.done [#allocation3], 30720
        $region52: #{tpu_custom_call.1} parent=47 // pred_fallthru
          _
        %p258 = scmp.lt.s32.totalorder %s19, 1
        %s259 = scalar_select %p258, %s19, 1
        %s260 = smul.addr %s259, 8
        %s261 = smul.addr %s260, 8
        %s262 = scalar_lea.vmem %s0, %s261
        %p263 = pneg %p40
        %p264 = pneg %p37
        %p265 = pneg %p61
        %p266 = pneg %p58
        %p267 = pneg %p82
        %p268 = pneg %p79
        %p269 = pneg %p103
        %p270 = pneg %p100
        %p271 = pneg %p124
        %p272 = pneg %p121
        %p273 = pneg %p145
        %p274 = pneg %p142
        %p275 = pneg %p166
        %p276 = pneg %p163
        %p277 = pneg %p192
        %p278 = pneg %p189
        %p279 = scmp.lt.s32.totalorder %s19, 1
        %s280 = scalar_select %p279, %s19, 1
        %s281 = smul.addr %s280, 2
        %s282 = smul.addr %s281, 8
        %s283 = scalar_lea.vmem %s7, %s282
        %p284 = scmp.lt.s32.totalorder %s19, 1
        %s285 = scalar_select %p284, %s19, 1
        %s286 = smul.addr %s285, 8
        %s287 = smul.addr %s286, 8
        %s288 = scalar_lea.vmem %s0, %s287
        %p289 = scmp.lt.s32.totalorder %s19, 1
        %s290 = scalar_select %p289, %s19, 1
        %s291 = smul.addr %s290, 2
        %s292 = smul.addr %s291, 8
        %s293 = scalar_lea.vmem %s7, %s292
        %v294 = vld [vmem:[%s288] sm:$0xff]
        %v295 = vld [vmem:[%s288 + $0x8] sm:$0x1f]
        %v296 = vld [vmem:[%s1] sm:$0xff]
        %v297 = vld [vmem:[%s1 + $0x8] sm:$0xff]
        %v298 = vld [vmem:[%s1 + $0x10] sm:$0xff]
        %v299 = vld [vmem:[%s1 + $0x18] sm:$0xff]
        %v300 = vld [vmem:[%s1 + $0x20] sm:$0xff]
        %v301 = vld [vmem:[%s1 + $0x28] sm:$0xff]
        %v302 = vld [vmem:[%s1 + $0x30] sm:$0xff]
        %v303 = vld [vmem:[%s1 + $0x38] sm:$0xff]
        %v304 = vld [vmem:[%s1 + $0x40] sm:$0xff]
        %s305 = scalar_lea.vmem %s288, 16
        %v306 = vld [vmem:[%s305] sm:$0xff]
        %v307 = vld [vmem:[%s305 + $0x8] sm:$0x1f]
        %s308 = scalar_lea.vmem %s1, 72
        %v309 = vld [vmem:[%s308] sm:$0xff]
        %v310 = vld [vmem:[%s308 + $0x8] sm:$0xff]
        %v311 = vld [vmem:[%s308 + $0x10] sm:$0xff]
        %v312 = vld [vmem:[%s308 + $0x18] sm:$0xff]
        %v313 = vld [vmem:[%s308 + $0x20] sm:$0xff]
        %v314 = vld [vmem:[%s308 + $0x28] sm:$0xff]
        %v315 = vld [vmem:[%s308 + $0x30] sm:$0xff]
        %v316 = vld [vmem:[%s308 + $0x38] sm:$0xff]
        %v317 = vld [vmem:[%s308 + $0x40] sm:$0xff]
        %vm318 = vcmask 195584
        %v320 = vsel %vm318, %v306, 0
        %v323 = vsel %vm318, %v307, 0
        %325 = vmatprep.subr.mxu0 %v310
        %326 = vmatpush1.msra.mxu0 %v309
        %327 = vmatprep.subr.mxu0 %v313
        %328 = vmatpush1.msra.mxu0 %v312
        %329 = vmatprep.subr.mxu0 %v316
        %330 = vmatpush1.msra.mxu0 %v315
        %331 = vmatprep.subr.mxu0 0.0
        %332 = vmatpush1.msra.mxu0 0.0
        %333 = vmatprep.subr.mxu0 0.0
        %334 = vmatpush1.msra.mxu0 0.0
        %335 = vmatprep.subr.mxu0 0.0
        %336 = vmatpush1.msra.mxu0 0.0
        %337 = vmatprep.subr.mxu0 0.0
        %338 = vmatpush1.msra.mxu0 0.0
        %339 = vmatprep.subr.mxu0 0.0
        %340 = vmatpush1.msra.mxu0 0.0
        %341 = vmatprep.subr.mxu0 0.0
        %342 = vmatpush1.msra.mxu0 0.0
        %343 = vmatprep.subr.mxu0 0.0
        %344 = vmatpush1.msra.mxu0 0.0
        %345 = vmatprep.subr.mxu0 0.0
        %346 = vmatpush1.msra.mxu0 0.0
        %347 = vmatprep.subr.mxu0 0.0
        %348 = vmatpush1.msra.mxu0 0.0
        %349 = vmatprep.subr.mxu0 0.0
        %350 = vmatpush1.msra.mxu0 0.0
        %351 = vmatprep.subr.mxu0 0.0
        %352 = vmatpush1.msra.mxu0 0.0
        %353 = vmatprep.subr.mxu0 0.0
        %354 = vmatpush1.msra.mxu0 0.0
        %355 = vmatprep.subr.mxu0 0.0
        %356 = vmatpush1.msra.mxu0 0.0
        %357 = vmatprep.subr.mxu0 0.0
        %358 = vmatpush1.msra.mxu0 0.0
        %359 = vmatprep.subr.mxu0 0.0
        %360 = vmatpush1.msra.mxu0 0.0
        %361 = vmatprep.subr.mxu0 0.0
        %362 = vmatpush1.msra.mxu0 0.0
        %363 = vmatprep.subr.mxu0 0.0
        %364 = vmatpush1.msra.mxu0 0.0
        %365 = vmatprep.subr.mxu0 0.0
        %366 = vmatpush1.msra.mxu0 0.0
        %367 = vmatprep.subr.mxu0 0.0
        %368 = vmatpush1.msra.mxu0 0.0
        %369 = vmatprep.subr.mxu0 0.0
        %370 = vmatpush1.msra.mxu0 0.0
        %371 = vmatprep.subr.mxu0 0.0
        %372 = vmatpush1.msra.mxu0 0.0
        %373 = vmatprep.subr.mxu0 0.0
        %374 = vmatpush1.msra.mxu0 0.0
        %375 = vmatprep.subr.mxu0 0.0
        %376 = vmatpush1.msra.mxu0 0.0
        %377 = vmatprep.subr.mxu0 0.0
        %378 = vmatpush1.msra.mxu0 0.0
        %379 = vmatprep.subr.mxu0 0.0
        %380 = vmatpush1.msra.mxu0 0.0
        %381 = vmatprep.subr.mxu0 0.0
        %382 = vmatpush1.msra.mxu0 0.0
        %383 = vmatprep.subr.mxu0 0.0
        %384 = vmatpush1.msra.mxu0 0.0
        %385 = vmatprep.subr.mxu0 0.0
        %386 = vmatpush1.msra.mxu0 0.0
        %387 = vmatprep.subr.mxu0 0.0
        %388 = vmatpush1.msra.mxu0 0.0
        %389 = vmatprep.mubr.f32.mxu0 0.0
        %390 = vmatmul.mubr.f32.gmra.mrb[0].mxu0 %v320
        %v391 = vpop.f32.mrb[0].mxu0
        %v392 = vadd.f32 0.0, %v391
        %v393 = vpop.f32.mrb[0].mxu0
        %v394 = vadd.f32 0.0, %v393
        %395 = vmatprep.mubr.f32.mxu0 0.0
        %396 = vmatmul.mubr.f32.gmra.mrb[0].mxu0 %v323
        %v397 = vpop.f32.mrb[0].mxu0
        %v398 = vadd.f32 0.0, %v397
        %v399 = vpop.f32.mrb[0].mxu0
        %v400 = vadd.f32 0.0, %v399
        %401 = vdwg.mxu0
        %402 = vmatprep.subr.mxu0 0.0
        %403 = vmatpush1.msra.mxu0 %v311
        %404 = vmatprep.subr.mxu0 0.0
        %405 = vmatpush1.msra.mxu0 %v314
        %406 = vmatprep.subr.mxu0 0.0
        %407 = vmatpush1.msra.mxu0 %v317
        %408 = vmatprep.subr.mxu0 0.0
        %409 = vmatpush1.msra.mxu0 0.0
        %410 = vmatprep.subr.mxu0 0.0
        %411 = vmatpush1.msra.mxu0 0.0
        %412 = vmatprep.subr.mxu0 0.0
        %413 = vmatpush1.msra.mxu0 0.0
        %414 = vmatprep.subr.mxu0 0.0
        %415 = vmatpush1.msra.mxu0 0.0
        %416 = vmatprep.subr.mxu0 0.0
        %417 = vmatpush1.msra.mxu0 0.0
        %418 = vmatprep.subr.mxu0 0.0
        %419 = vmatpush1.msra.mxu0 0.0
        %420 = vmatprep.subr.mxu0 0.0
        %421 = vmatpush1.msra.mxu0 0.0
        %422 = vmatprep.subr.mxu0 0.0
        %423 = vmatpush1.msra.mxu0 0.0
        %424 = vmatprep.subr.mxu0 0.0
        %425 = vmatpush1.msra.mxu0 0.0
        %426 = vmatprep.subr.mxu0 0.0
        %427 = vmatpush1.msra.mxu0 0.0
        %428 = vmatprep.subr.mxu0 0.0
        %429 = vmatpush1.msra.mxu0 0.0
        %430 = vmatprep.subr.mxu0 0.0
        %431 = vmatpush1.msra.mxu0 0.0
        %432 = vmatprep.subr.mxu0 0.0
        %433 = vmatpush1.msra.mxu0 0.0
        %434 = vmatprep.subr.mxu0 0.0
        %435 = vmatpush1.msra.mxu0 0.0
        %436 = vmatprep.subr.mxu0 0.0
        %437 = vmatpush1.msra.mxu0 0.0
        %438 = vmatprep.subr.mxu0 0.0
        %439 = vmatpush1.msra.mxu0 0.0
        %440 = vmatprep.subr.mxu0 0.0
        %441 = vmatpush1.msra.mxu0 0.0
        %442 = vmatprep.subr.mxu0 0.0
        %443 = vmatpush1.msra.mxu0 0.0
        %444 = vmatprep.subr.mxu0 0.0
        %445 = vmatpush1.msra.mxu0 0.0
        %446 = vmatprep.subr.mxu0 0.0
        %447 = vmatpush1.msra.mxu0 0.0
        %448 = vmatprep.subr.mxu0 0.0
        %449 = vmatpush1.msra.mxu0 0.0
        %450 = vmatprep.subr.mxu0 0.0
        %451 = vmatpush1.msra.mxu0 0.0
        %452 = vmatprep.subr.mxu0 0.0
        %453 = vmatpush1.msra.mxu0 0.0
        %454 = vmatprep.subr.mxu0 0.0
        %455 = vmatpush1.msra.mxu0 0.0
        %456 = vmatprep.subr.mxu0 0.0
        %457 = vmatpush1.msra.mxu0 0.0
        %458 = vmatprep.subr.mxu0 0.0
        %459 = vmatpush1.msra.mxu0 0.0
        %460 = vmatprep.subr.mxu0 0.0
        %461 = vmatpush1.msra.mxu0 0.0
        %462 = vmatprep.subr.mxu0 0.0
        %463 = vmatpush1.msra.mxu0 0.0
        %464 = vmatprep.subr.mxu0 0.0
        %465 = vmatpush1.msra.mxu0 0.0
        %466 = vmatprep.mubr.f32.mxu0 0.0
        %467 = vmatmul.mubr.f32.gmra.mrb[0].mxu0 %v320
        %v468 = vpop.f32.mrb[0].mxu0
        %v469 = vadd.f32 0.0, %v468
        %v470 = vpop.f32.mrb[0].mxu0
        %471 = vmatprep.mubr.f32.mxu0 0.0
        %472 = vmatmul.mubr.f32.gmra.mrb[0].mxu0 %v323
        %v473 = vpop.f32.mrb[0].mxu0
        %v474 = vadd.f32 0.0, %v473
        %v475 = vpop.f32.mrb[0].mxu0
        %476 = vdwg.mxu0
        %v478 = vsel %vm318, %v294, 0
        %v481 = vsel %vm318, %v295, 0
        %483 = vmatprep.subr.mxu0 %v297
        %484 = vmatpush1.msra.mxu0 %v296
        %485 = vmatprep.subr.mxu0 %v300
        %486 = vmatpush1.msra.mxu0 %v299
        %487 = vmatprep.subr.mxu0 %v303
        %488 = vmatpush1.msra.mxu0 %v302
        %489 = vmatprep.subr.mxu0 0.0
        %490 = vmatpush1.msra.mxu0 0.0
        %491 = vmatprep.subr.mxu0 0.0
        %492 = vmatpush1.msra.mxu0 0.0
        %493 = vmatprep.subr.mxu0 0.0
        %494 = vmatpush1.msra.mxu0 0.0
        %495 = vmatprep.subr.mxu0 0.0
        %496 = vmatpush1.msra.mxu0 0.0
        %497 = vmatprep.subr.mxu0 0.0
        %498 = vmatpush1.msra.mxu0 0.0
        %499 = vmatprep.subr.mxu0 0.0
        %500 = vmatpush1.msra.mxu0 0.0
        %501 = vmatprep.subr.mxu0 0.0
        %502 = vmatpush1.msra.mxu0 0.0
        %503 = vmatprep.subr.mxu0 0.0
        %504 = vmatpush1.msra.mxu0 0.0
        %505 = vmatprep.subr.mxu0 0.0
        %506 = vmatpush1.msra.mxu0 0.0
        %507 = vmatprep.subr.mxu0 0.0
        %508 = vmatpush1.msra.mxu0 0.0
        %509 = vmatprep.subr.mxu0 0.0
        %510 = vmatpush1.msra.mxu0 0.0
        %511 = vmatprep.subr.mxu0 0.0
        %512 = vmatpush1.msra.mxu0 0.0
        %513 = vmatprep.subr.mxu0 0.0
        %514 = vmatpush1.msra.mxu0 0.0
        %515 = vmatprep.subr.mxu0 0.0
        %516 = vmatpush1.msra.mxu0 0.0
        %517 = vmatprep.subr.mxu0 0.0
        %518 = vmatpush1.msra.mxu0 0.0
        %519 = vmatprep.subr.mxu0 0.0
        %520 = vmatpush1.msra.mxu0 0.0
        %521 = vmatprep.subr.mxu0 0.0
        %522 = vmatpush1.msra.mxu0 0.0
        %523 = vmatprep.subr.mxu0 0.0
        %524 = vmatpush1.msra.mxu0 0.0
        %525 = vmatprep.subr.mxu0 0.0
        %526 = vmatpush1.msra.mxu0 0.0
        %527 = vmatprep.subr.mxu0 0.0
        %528 = vmatpush1.msra.mxu0 0.0
        %529 = vmatprep.subr.mxu0 0.0
        %530 = vmatpush1.msra.mxu0 0.0
        %531 = vmatprep.subr.mxu0 0.0
        %532 = vmatpush1.msra.mxu0 0.0
        %533 = vmatprep.subr.mxu0 0.0
        %534 = vmatpush1.msra.mxu0 0.0
        %535 = vmatprep.subr.mxu0 0.0
        %536 = vmatpush1.msra.mxu0 0.0
        %537 = vmatprep.subr.mxu0 0.0
        %538 = vmatpush1.msra.mxu0 0.0
        %539 = vmatprep.subr.mxu0 0.0
        %540 = vmatpush1.msra.mxu0 0.0
        %541 = vmatprep.subr.mxu0 0.0
        %542 = vmatpush1.msra.mxu0 0.0
        %543 = vmatprep.subr.mxu0 0.0
        %544 = vmatpush1.msra.mxu0 0.0
        %545 = vmatprep.subr.mxu0 0.0
        %546 = vmatpush1.msra.mxu0 0.0
        %547 = vmatprep.mubr.f32.mxu0 0.0
        %548 = vmatmul.mubr.f32.gmra.mrb[0].mxu0 %v478
        %v549 = vpop.f32.mrb[0].mxu0
        %v550 = vadd.f32 %v392, %v549
        %v551 = vpop.f32.mrb[0].mxu0
        %v552 = vadd.f32 %v394, %v551
        %553 = vmatprep.mubr.f32.mxu0 0.0
        %554 = vmatmul.mubr.f32.gmra.mrb[0].mxu0 %v481
        %v555 = vpop.f32.mrb[0].mxu0
        %v556 = vadd.f32 %v398, %v555
        %v557 = vpop.f32.mrb[0].mxu0
        %v558 = vadd.f32 %v400, %v557
        %559 = vdwg.mxu0
        %560 = vmatprep.subr.mxu0 0.0
        %561 = vmatpush1.msra.mxu0 %v298
        %562 = vmatprep.subr.mxu0 0.0
        %563 = vmatpush1.msra.mxu0 %v301
        %564 = vmatprep.subr.mxu0 0.0
        %565 = vmatpush1.msra.mxu0 %v304
        %566 = vmatprep.subr.mxu0 0.0
        %567 = vmatpush1.msra.mxu0 0.0
        %568 = vmatprep.subr.mxu0 0.0
        %569 = vmatpush1.msra.mxu0 0.0
        %570 = vmatprep.subr.mxu0 0.0
        %571 = vmatpush1.msra.mxu0 0.0
        %572 = vmatprep.subr.mxu0 0.0
        %573 = vmatpush1.msra.mxu0 0.0
        %574 = vmatprep.subr.mxu0 0.0
        %575 = vmatpush1.msra.mxu0 0.0
        %576 = vmatprep.subr.mxu0 0.0
        %577 = vmatpush1.msra.mxu0 0.0
        %578 = vmatprep.subr.mxu0 0.0
        %579 = vmatpush1.msra.mxu0 0.0
        %580 = vmatprep.subr.mxu0 0.0
        %581 = vmatpush1.msra.mxu0 0.0
        %582 = vmatprep.subr.mxu0 0.0
        %583 = vmatpush1.msra.mxu0 0.0
        %584 = vmatprep.subr.mxu0 0.0
        %585 = vmatpush1.msra.mxu0 0.0
        %586 = vmatprep.subr.mxu0 0.0
        %587 = vmatpush1.msra.mxu0 0.0
        %588 = vmatprep.subr.mxu0 0.0
        %589 = vmatpush1.msra.mxu0 0.0
        %590 = vmatprep.subr.mxu0 0.0
        %591 = vmatpush1.msra.mxu0 0.0
        %592 = vmatprep.subr.mxu0 0.0
        %593 = vmatpush1.msra.mxu0 0.0
        %594 = vmatprep.subr.mxu0 0.0
        %595 = vmatpush1.msra.mxu0 0.0
        %596 = vmatprep.subr.mxu0 0.0
        %597 = vmatpush1.msra.mxu0 0.0
        %598 = vmatprep.subr.mxu0 0.0
        %599 = vmatpush1.msra.mxu0 0.0
        %600 = vmatprep.subr.mxu0 0.0
        %601 = vmatpush1.msra.mxu0 0.0
        %602 = vmatprep.subr.mxu0 0.0
        %603 = vmatpush1.msra.mxu0 0.0
        %604 = vmatprep.subr.mxu0 0.0
        %605 = vmatpush1.msra.mxu0 0.0
        %606 = vmatprep.subr.mxu0 0.0
        %607 = vmatpush1.msra.mxu0 0.0
        %608 = vmatprep.subr.mxu0 0.0
        %609 = vmatpush1.msra.mxu0 0.0
        %610 = vmatprep.subr.mxu0 0.0
        %611 = vmatpush1.msra.mxu0 0.0
        %612 = vmatprep.subr.mxu0 0.0
        %613 = vmatpush1.msra.mxu0 0.0
        %614 = vmatprep.subr.mxu0 0.0
        %615 = vmatpush1.msra.mxu0 0.0
        %616 = vmatprep.subr.mxu0 0.0
        %617 = vmatpush1.msra.mxu0 0.0
        %618 = vmatprep.subr.mxu0 0.0
        %619 = vmatpush1.msra.mxu0 0.0
        %620 = vmatprep.subr.mxu0 0.0
        %621 = vmatpush1.msra.mxu0 0.0
        %622 = vmatprep.subr.mxu0 0.0
        %623 = vmatpush1.msra.mxu0 0.0
        %624 = vmatprep.mubr.f32.mxu0 0.0
        %625 = vmatmul.mubr.f32.gmra.mrb[0].mxu0 %v478
        %v626 = vpop.f32.mrb[0].mxu0
        %v627 = vadd.f32 %v469, %v626
        %v628 = vpop.f32.mrb[0].mxu0
        %629 = vmatprep.mubr.f32.mxu0 0.0
        %630 = vmatmul.mubr.f32.gmra.mrb[0].mxu0 %v481
        %v631 = vpop.f32.mrb[0].mxu0
        %v632 = vadd.f32 %v474, %v631
        %v633 = vpop.f32.mrb[0].mxu0
        %634 = vdwg.mxu0
        %s635 = scalar_lea.vmem %s288, 32
        %v636 = vld [vmem:[%s635] sm:$0xff]
        %v637 = vld [vmem:[%s635 + $0x8] sm:$0x1f]
        %s638 = scalar_lea.vmem %s1, 144
        %v639 = vld [vmem:[%s638] sm:$0xff]
        %v640 = vld [vmem:[%s638 + $0x8] sm:$0xff]
        %v641 = vld [vmem:[%s638 + $0x10] sm:$0xff]
        %v642 = vld [vmem:[%s638 + $0x18] sm:$0xff]
        %v643 = vld [vmem:[%s638 + $0x20] sm:$0xff]
        %v644 = vld [vmem:[%s638 + $0x28] sm:$0xff]
        %v645 = vld [vmem:[%s638 + $0x30] sm:$0xff]
        %v646 = vld [vmem:[%s638 + $0x38] sm:$0xff]
        %v647 = vld [vmem:[%s638 + $0x40] sm:$0xff]
        %v649 = vsel %vm318, %v636, 0
        %v652 = vsel %vm318, %v637, 0
        %654 = vmatprep.subr.mxu0 %v640
        %655 = vmatpush1.msra.mxu0 %v639
        %656 = vmatprep.subr.mxu0 %v643
        %657 = vmatpush1.msra.mxu0 %v642
        %658 = vmatprep.subr.mxu0 %v646
        %659 = vmatpush1.msra.mxu0 %v645
        %660 = vmatprep.subr.mxu0 0.0
        %661 = vmatpush1.msra.mxu0 0.0
        %662 = vmatprep.subr.mxu0 0.0
        %663 = vmatpush1.msra.mxu0 0.0
        %664 = vmatprep.subr.mxu0 0.0
        %665 = vmatpush1.msra.mxu0 0.0
        %666 = vmatprep.subr.mxu0 0.0
        %667 = vmatpush1.msra.mxu0 0.0
        %668 = vmatprep.subr.mxu0 0.0
        %669 = vmatpush1.msra.mxu0 0.0
        %670 = vmatprep.subr.mxu0 0.0
        %671 = vmatpush1.msra.mxu0 0.0
        %672 = vmatprep.subr.mxu0 0.0
        %673 = vmatpush1.msra.mxu0 0.0
        %674 = vmatprep.subr.mxu0 0.0
        %675 = vmatpush1.msra.mxu0 0.0
        %676 = vmatprep.subr.mxu0 0.0
        %677 = vmatpush1.msra.mxu0 0.0
        %678 = vmatprep.subr.mxu0 0.0
        %679 = vmatpush1.msra.mxu0 0.0
        %680 = vmatprep.subr.mxu0 0.0
        %681 = vmatpush1.msra.mxu0 0.0
        %682 = vmatprep.subr.mxu0 0.0
        %683 = vmatpush1.msra.mxu0 0.0
        %684 = vmatprep.subr.mxu0 0.0
        %685 = vmatpush1.msra.mxu0 0.0
        %686 = vmatprep.subr.mxu0 0.0
        %687 = vmatpush1.msra.mxu0 0.0
        %688 = vmatprep.subr.mxu0 0.0
        %689 = vmatpush1.msra.mxu0 0.0
        %690 = vmatprep.subr.mxu0 0.0
        %691 = vmatpush1.msra.mxu0 0.0
        %692 = vmatprep.subr.mxu0 0.0
        %693 = vmatpush1.msra.mxu0 0.0
        %694 = vmatprep.subr.mxu0 0.0
        %695 = vmatpush1.msra.mxu0 0.0
        %696 = vmatprep.subr.mxu0 0.0
        %697 = vmatpush1.msra.mxu0 0.0
        %698 = vmatprep.subr.mxu0 0.0
        %699 = vmatpush1.msra.mxu0 0.0
        %700 = vmatprep.subr.mxu0 0.0
        %701 = vmatpush1.msra.mxu0 0.0
        %702 = vmatprep.subr.mxu0 0.0
        %703 = vmatpush1.msra.mxu0 0.0
        %704 = vmatprep.subr.mxu0 0.0
        %705 = vmatpush1.msra.mxu0 0.0
        %706 = vmatprep.subr.mxu0 0.0
        %707 = vmatpush1.msra.mxu0 0.0
        %708 = vmatprep.subr.mxu0 0.0
        %709 = vmatpush1.msra.mxu0 0.0
        %710 = vmatprep.subr.mxu0 0.0
        %711 = vmatpush1.msra.mxu0 0.0
        %712 = vmatprep.subr.mxu0 0.0
        %713 = vmatpush1.msra.mxu0 0.0
        %714 = vmatprep.subr.mxu0 0.0
        %715 = vmatpush1.msra.mxu0 0.0
        %716 = vmatprep.subr.mxu0 0.0
        %717 = vmatpush1.msra.mxu0 0.0
        %718 = vmatprep.mubr.f32.mxu0 0.0
        %719 = vmatmul.mubr.f32.gmra.mrb[0].mxu0 %v649
        %v720 = vpop.f32.mrb[0].mxu0
        %v721 = vadd.f32 0.0, %v720
        %v722 = vpop.f32.mrb[0].mxu0
        %v723 = vadd.f32 0.0, %v722
        %724 = vmatprep.mubr.f32.mxu0 0.0
        %725 = vmatmul.mubr.f32.gmra.mrb[0].mxu0 %v652
        %v726 = vpop.f32.mrb[0].mxu0
        %v727 = vadd.f32 0.0, %v726
        %v728 = vpop.f32.mrb[0].mxu0
        %v729 = vadd.f32 0.0, %v728
        %730 = vdwg.mxu0
        %731 = vmatprep.subr.mxu0 0.0
        %732 = vmatpush1.msra.mxu0 %v641
        %733 = vmatprep.subr.mxu0 0.0
        %734 = vmatpush1.msra.mxu0 %v644
        %735 = vmatprep.subr.mxu0 0.0
        %736 = vmatpush1.msra.mxu0 %v647
        %737 = vmatprep.subr.mxu0 0.0
        %738 = vmatpush1.msra.mxu0 0.0
        %739 = vmatprep.subr.mxu0 0.0
        %740 = vmatpush1.msra.mxu0 0.0
        %741 = vmatprep.subr.mxu0 0.0
        %742 = vmatpush1.msra.mxu0 0.0
        %743 = vmatprep.subr.mxu0 0.0
        %744 = vmatpush1.msra.mxu0 0.0
        %745 = vmatprep.subr.mxu0 0.0
        %746 = vmatpush1.msra.mxu0 0.0
        %747 = vmatprep.subr.mxu0 0.0
        %748 = vmatpush1.msra.mxu0 0.0
        %749 = vmatprep.subr.mxu0 0.0
        %750 = vmatpush1.msra.mxu0 0.0
        %751 = vmatprep.subr.mxu0 0.0
        %752 = vmatpush1.msra.mxu0 0.0
        %753 = vmatprep.subr.mxu0 0.0
        %754 = vmatpush1.msra.mxu0 0.0
        %755 = vmatprep.subr.mxu0 0.0
        %756 = vmatpush1.msra.mxu0 0.0
        %757 = vmatprep.subr.mxu0 0.0
        %758 = vmatpush1.msra.mxu0 0.0
        %759 = vmatprep.subr.mxu0 0.0
        %760 = vmatpush1.msra.mxu0 0.0
        %761 = vmatprep.subr.mxu0 0.0
        %762 = vmatpush1.msra.mxu0 0.0
        %763 = vmatprep.subr.mxu0 0.0
        %764 = vmatpush1.msra.mxu0 0.0
        %765 = vmatprep.subr.mxu0 0.0
        %766 = vmatpush1.msra.mxu0 0.0
        %767 = vmatprep.subr.mxu0 0.0
        %768 = vmatpush1.msra.mxu0 0.0
        %769 = vmatprep.subr.mxu0 0.0
        %770 = vmatpush1.msra.mxu0 0.0
        %771 = vmatprep.subr.mxu0 0.0
        %772 = vmatpush1.msra.mxu0 0.0
        %773 = vmatprep.subr.mxu0 0.0
        %774 = vmatpush1.msra.mxu0 0.0
        %775 = vmatprep.subr.mxu0 0.0
        %776 = vmatpush1.msra.mxu0 0.0
        %777 = vmatprep.subr.mxu0 0.0
        %778 = vmatpush1.msra.mxu0 0.0
        %779 = vmatprep.subr.mxu0 0.0
        %780 = vmatpush1.msra.mxu0 0.0
        %781 = vmatprep.subr.mxu0 0.0
        %782 = vmatpush1.msra.mxu0 0.0
        %783 = vmatprep.subr.mxu0 0.0
        %784 = vmatpush1.msra.mxu0 0.0
        %785 = vmatprep.subr.mxu0 0.0
        %786 = vmatpush1.msra.mxu0 0.0
        %787 = vmatprep.subr.mxu0 0.0
        %788 = vmatpush1.msra.mxu0 0.0
        %789 = vmatprep.subr.mxu0 0.0
        %790 = vmatpush1.msra.mxu0 0.0
        %791 = vmatprep.subr.mxu0 0.0
        %792 = vmatpush1.msra.mxu0 0.0
        %793 = vmatprep.subr.mxu0 0.0
        %794 = vmatpush1.msra.mxu0 0.0
        %795 = vmatprep.mubr.f32.mxu0 0.0
        %796 = vmatmul.mubr.f32.gmra.mrb[0].mxu0 %v649
        %v797 = vpop.f32.mrb[0].mxu0
        %v798 = vadd.f32 0.0, %v797
        %v799 = vpop.f32.mrb[0].mxu0
        %800 = vmatprep.mubr.f32.mxu0 0.0
        %801 = vmatmul.mubr.f32.gmra.mrb[0].mxu0 %v652
        %v802 = vpop.f32.mrb[0].mxu0
        %v803 = vadd.f32 0.0, %v802
        %v804 = vpop.f32.mrb[0].mxu0
        %805 = vdwg.mxu0
        %v806 = vadd.f32 %v550, %v721
        %v807 = vadd.f32 %v552, %v723
        %v808 = vadd.f32 %v627, %v798
        %v809 = vadd.f32 %v556, %v727
        %v810 = vadd.f32 %v558, %v729
        %v811 = vadd.f32 %v632, %v803
        %v812 = vld [vmem:[%s4] sm:$0x7]
        %v814 = vlaneseq
        %v815 = vshrl.u32 %v814, 7
        %v816 = vsub.s32 0, %v815
        %v817 = vrot.slane %v812, %v816
        %v818 = vlaneseq
        %v819 = vshrl.u32 %v818, 7
        %v820 = vsub.s32 1, %v819
        %v821 = vrot.slane %v812, %v820
        %v822 = vlaneseq
        %v823 = vshrl.u32 %v822, 7
        %v824 = vsub.s32 2, %v823
        %v825 = vrot.slane %v812, %v824
        %v829 = vadd.f32 %v806, %v817
        %v830 = vadd.f32 %v807, %v821
        %v831 = vadd.f32 %v808, %v825
        %v832 = vadd.f32 %v809, %v817
        %v833 = vadd.f32 %v810, %v821
        %v834 = vadd.f32 %v811, %v825
        %v835 = vmax.f32 %v829, 0.0
        %v836 = vmax.f32 %v830, 0.0
        %v837 = vmax.f32 %v831, 0.0
        %v838 = vmax.f32 %v832, 0.0
        %v839 = vmax.f32 %v833, 0.0
        %v840 = vmax.f32 %v834, 0.0
        %v841 = vld [vmem:[%s635] sm:$0xff]
        %v842 = vld [vmem:[%s635 + $0x8] sm:$0xf]
        %s843 = scalar_lea.vmem %s288, 48
        %v844 = vld [vmem:[%s843] sm:$0xff]
        %v845 = vld [vmem:[%s843 + $0x8] sm:$0xf]
        %v847 = vsel %vm318, %v844, 0
        %v850 = vsel %vm318, %v845, 0
        %852 = vmatprep.subr.mxu0 %v310
        %853 = vmatpush1.msra.mxu0 %v309
        %854 = vmatprep.subr.mxu0 %v313
        %855 = vmatpush1.msra.mxu0 %v312
        %856 = vmatprep.subr.mxu0 %v316
        %857 = vmatpush1.msra.mxu0 %v315
        %858 = vmatprep.subr.mxu0 0.0
        %859 = vmatpush1.msra.mxu0 0.0
        %860 = vmatprep.subr.mxu0 0.0
        %861 = vmatpush1.msra.mxu0 0.0
        %862 = vmatprep.subr.mxu0 0.0
        %863 = vmatpush1.msra.mxu0 0.0
        %864 = vmatprep.subr.mxu0 0.0
        %865 = vmatpush1.msra.mxu0 0.0
        %866 = vmatprep.subr.mxu0 0.0
        %867 = vmatpush1.msra.mxu0 0.0
        %868 = vmatprep.subr.mxu0 0.0
        %869 = vmatpush1.msra.mxu0 0.0
        %870 = vmatprep.subr.mxu0 0.0
        %871 = vmatpush1.msra.mxu0 0.0
        %872 = vmatprep.subr.mxu0 0.0
        %873 = vmatpush1.msra.mxu0 0.0
        %874 = vmatprep.subr.mxu0 0.0
        %875 = vmatpush1.msra.mxu0 0.0
        %876 = vmatprep.subr.mxu0 0.0
        %877 = vmatpush1.msra.mxu0 0.0
        %878 = vmatprep.subr.mxu0 0.0
        %879 = vmatpush1.msra.mxu0 0.0
        %880 = vmatprep.subr.mxu0 0.0
        %881 = vmatpush1.msra.mxu0 0.0
        %882 = vmatprep.subr.mxu0 0.0
        %883 = vmatpush1.msra.mxu0 0.0
        %884 = vmatprep.subr.mxu0 0.0
        %885 = vmatpush1.msra.mxu0 0.0
        %886 = vmatprep.subr.mxu0 0.0
        %887 = vmatpush1.msra.mxu0 0.0
        %888 = vmatprep.subr.mxu0 0.0
        %889 = vmatpush1.msra.mxu0 0.0
        %890 = vmatprep.subr.mxu0 0.0
        %891 = vmatpush1.msra.mxu0 0.0
        %892 = vmatprep.subr.mxu0 0.0
        %893 = vmatpush1.msra.mxu0 0.0
        %894 = vmatprep.subr.mxu0 0.0
        %895 = vmatpush1.msra.mxu0 0.0
        %896 = vmatprep.subr.mxu0 0.0
        %897 = vmatpush1.msra.mxu0 0.0
        %898 = vmatprep.subr.mxu0 0.0
        %899 = vmatpush1.msra.mxu0 0.0
        %900 = vmatprep.subr.mxu0 0.0
        %901 = vmatpush1.msra.mxu0 0.0
        %902 = vmatprep.subr.mxu0 0.0
        %903 = vmatpush1.msra.mxu0 0.0
        %904 = vmatprep.subr.mxu0 0.0
        %905 = vmatpush1.msra.mxu0 0.0
        %906 = vmatprep.subr.mxu0 0.0
        %907 = vmatpush1.msra.mxu0 0.0
        %908 = vmatprep.subr.mxu0 0.0
        %909 = vmatpush1.msra.mxu0 0.0
        %910 = vmatprep.subr.mxu0 0.0
        %911 = vmatpush1.msra.mxu0 0.0
        %912 = vmatprep.subr.mxu0 0.0
        %913 = vmatpush1.msra.mxu0 0.0
        %914 = vmatprep.subr.mxu0 0.0
        %915 = vmatpush1.msra.mxu0 0.0
        %916 = vmatprep.mubr.f32.mxu0 0.0
        %917 = vmatmul.mubr.f32.gmra.mrb[0].mxu0 %v847
        %v918 = vpop.f32.mrb[0].mxu0
        %v919 = vadd.f32 0.0, %v918
        %v920 = vpop.f32.mrb[0].mxu0
        %v921 = vadd.f32 0.0, %v920
        %922 = vmatprep.mubr.f32.mxu0 0.0
        %923 = vmatmul.mubr.f32.gmra.mrb[0].mxu0 %v850
        %v924 = vpop.f32.mrb[0].mxu0
        %v925 = vadd.f32 0.0, %v924
        %v926 = vpop.f32.mrb[0].mxu0
        %v927 = vadd.f32 0.0, %v926
        %928 = vdwg.mxu0
        %929 = vmatprep.subr.mxu0 0.0
        %930 = vmatpush1.msra.mxu0 %v311
        %931 = vmatprep.subr.mxu0 0.0
        %932 = vmatpush1.msra.mxu0 %v314
        %933 = vmatprep.subr.mxu0 0.0
        %934 = vmatpush1.msra.mxu0 %v317
        %935 = vmatprep.subr.mxu0 0.0
        %936 = vmatpush1.msra.mxu0 0.0
        %937 = vmatprep.subr.mxu0 0.0
        %938 = vmatpush1.msra.mxu0 0.0
        %939 = vmatprep.subr.mxu0 0.0
        %940 = vmatpush1.msra.mxu0 0.0
        %941 = vmatprep.subr.mxu0 0.0
        %942 = vmatpush1.msra.mxu0 0.0
        %943 = vmatprep.subr.mxu0 0.0
        %944 = vmatpush1.msra.mxu0 0.0
        %945 = vmatprep.subr.mxu0 0.0
        %946 = vmatpush1.msra.mxu0 0.0
        %947 = vmatprep.subr.mxu0 0.0
        %948 = vmatpush1.msra.mxu0 0.0
        %949 = vmatprep.subr.mxu0 0.0
        %950 = vmatpush1.msra.mxu0 0.0
        %951 = vmatprep.subr.mxu0 0.0
        %952 = vmatpush1.msra.mxu0 0.0
        %953 = vmatprep.subr.mxu0 0.0
        %954 = vmatpush1.msra.mxu0 0.0
        %955 = vmatprep.subr.mxu0 0.0
        %956 = vmatpush1.msra.mxu0 0.0
        %957 = vmatprep.subr.mxu0 0.0
        %958 = vmatpush1.msra.mxu0 0.0
        %959 = vmatprep.subr.mxu0 0.0
        %960 = vmatpush1.msra.mxu0 0.0
        %961 = vmatprep.subr.mxu0 0.0
        %962 = vmatpush1.msra.mxu0 0.0
        %963 = vmatprep.subr.mxu0 0.0
        %964 = vmatpush1.msra.mxu0 0.0
        %965 = vmatprep.subr.mxu0 0.0
        %966 = vmatpush1.msra.mxu0 0.0
        %967 = vmatprep.subr.mxu0 0.0
        %968 = vmatpush1.msra.mxu0 0.0
        %969 = vmatprep.subr.mxu0 0.0
        %970 = vmatpush1.msra.mxu0 0.0
        %971 = vmatprep.subr.mxu0 0.0
        %972 = vmatpush1.msra.mxu0 0.0
        %973 = vmatprep.subr.mxu0 0.0
        %974 = vmatpush1.msra.mxu0 0.0
        %975 = vmatprep.subr.mxu0 0.0
        %976 = vmatpush1.msra.mxu0 0.0
        %977 = vmatprep.subr.mxu0 0.0
        %978 = vmatpush1.msra.mxu0 0.0
        %979 = vmatprep.subr.mxu0 0.0
        %980 = vmatpush1.msra.mxu0 0.0
        %981 = vmatprep.subr.mxu0 0.0
        %982 = vmatpush1.msra.mxu0 0.0
        %983 = vmatprep.subr.mxu0 0.0
        %984 = vmatpush1.msra.mxu0 0.0
        %985 = vmatprep.subr.mxu0 0.0
        %986 = vmatpush1.msra.mxu0 0.0
        %987 = vmatprep.subr.mxu0 0.0
        %988 = vmatpush1.msra.mxu0 0.0
        %989 = vmatprep.subr.mxu0 0.0
        %990 = vmatpush1.msra.mxu0 0.0
        %991 = vmatprep.subr.mxu0 0.0
        %992 = vmatpush1.msra.mxu0 0.0
        %993 = vmatprep.mubr.f32.mxu0 0.0
        %994 = vmatmul.mubr.f32.gmra.mrb[0].mxu0 %v847
        %v995 = vpop.f32.mrb[0].mxu0
        %v996 = vadd.f32 0.0, %v995
        %v997 = vpop.f32.mrb[0].mxu0
        %998 = vmatprep.mubr.f32.mxu0 0.0
        %999 = vmatmul.mubr.f32.gmra.mrb[0].mxu0 %v850
        %v1000 = vpop.f32.mrb[0].mxu0
        %v1001 = vadd.f32 0.0, %v1000
        %v1002 = vpop.f32.mrb[0].mxu0
        %1003 = vdwg.mxu0
        %v1005 = vsel %vm318, %v841, 0
        %v1008 = vsel %vm318, %v842, 0
        %1010 = vmatprep.subr.mxu0 %v297
        %1011 = vmatpush1.msra.mxu0 %v296
        %1012 = vmatprep.subr.mxu0 %v300
        %1013 = vmatpush1.msra.mxu0 %v299
        %1014 = vmatprep.subr.mxu0 %v303
        %1015 = vmatpush1.msra.mxu0 %v302
        %1016 = vmatprep.subr.mxu0 0.0
        %1017 = vmatpush1.msra.mxu0 0.0
        %1018 = vmatprep.subr.mxu0 0.0
        %1019 = vmatpush1.msra.mxu0 0.0
        %1020 = vmatprep.subr.mxu0 0.0
        %1021 = vmatpush1.msra.mxu0 0.0
        %1022 = vmatprep.subr.mxu0 0.0
        %1023 = vmatpush1.msra.mxu0 0.0
        %1024 = vmatprep.subr.mxu0 0.0
        %1025 = vmatpush1.msra.mxu0 0.0
        %1026 = vmatprep.subr.mxu0 0.0
        %1027 = vmatpush1.msra.mxu0 0.0
        %1028 = vmatprep.subr.mxu0 0.0
        %1029 = vmatpush1.msra.mxu0 0.0
        %1030 = vmatprep.subr.mxu0 0.0
        %1031 = vmatpush1.msra.mxu0 0.0
        %1032 = vmatprep.subr.mxu0 0.0
        %1033 = vmatpush1.msra.mxu0 0.0
        %1034 = vmatprep.subr.mxu0 0.0
        %1035 = vmatpush1.msra.mxu0 0.0
        %1036 = vmatprep.subr.mxu0 0.0
        %1037 = vmatpush1.msra.mxu0 0.0
        %1038 = vmatprep.subr.mxu0 0.0
        %1039 = vmatpush1.msra.mxu0 0.0
        %1040 = vmatprep.subr.mxu0 0.0
        %1041 = vmatpush1.msra.mxu0 0.0
        %1042 = vmatprep.subr.mxu0 0.0
        %1043 = vmatpush1.msra.mxu0 0.0
        %1044 = vmatprep.subr.mxu0 0.0
        %1045 = vmatpush1.msra.mxu0 0.0
        %1046 = vmatprep.subr.mxu0 0.0
        %1047 = vmatpush1.msra.mxu0 0.0
        %1048 = vmatprep.subr.mxu0 0.0
        %1049 = vmatpush1.msra.mxu0 0.0
        %1050 = vmatprep.subr.mxu0 0.0
        %1051 = vmatpush1.msra.mxu0 0.0
        %1052 = vmatprep.subr.mxu0 0.0
        %1053 = vmatpush1.msra.mxu0 0.0
        %1054 = vmatprep.subr.mxu0 0.0
        %1055 = vmatpush1.msra.mxu0 0.0
        %1056 = vmatprep.subr.mxu0 0.0
        %1057 = vmatpush1.msra.mxu0 0.0
        %1058 = vmatprep.subr.mxu0 0.0
        %1059 = vmatpush1.msra.mxu0 0.0
        %1060 = vmatprep.subr.mxu0 0.0
        %1061 = vmatpush1.msra.mxu0 0.0
        %1062 = vmatprep.subr.mxu0 0.0
        %1063 = vmatpush1.msra.mxu0 0.0
        %1064 = vmatprep.subr.mxu0 0.0
        %1065 = vmatpush1.msra.mxu0 0.0
        %1066 = vmatprep.subr.mxu0 0.0
        %1067 = vmatpush1.msra.mxu0 0.0
        %1068 = vmatprep.subr.mxu0 0.0
        %1069 = vmatpush1.msra.mxu0 0.0
        %1070 = vmatprep.subr.mxu0 0.0
        %1071 = vmatpush1.msra.mxu0 0.0
        %1072 = vmatprep.subr.mxu0 0.0
        %1073 = vmatpush1.msra.mxu0 0.0
        %1074 = vmatprep.mubr.f32.mxu0 0.0
        %1075 = vmatmul.mubr.f32.gmra.mrb[0].mxu0 %v1005
        %v1076 = vpop.f32.mrb[0].mxu0
        %v1077 = vadd.f32 %v919, %v1076
        %v1078 = vpop.f32.mrb[0].mxu0
        %v1079 = vadd.f32 %v921, %v1078
        %1080 = vmatprep.mubr.f32.mxu0 0.0
        %1081 = vmatmul.mubr.f32.gmra.mrb[0].mxu0 %v1008
        %v1082 = vpop.f32.mrb[0].mxu0
        %v1083 = vadd.f32 %v925, %v1082
        %v1084 = vpop.f32.mrb[0].mxu0
        %v1085 = vadd.f32 %v927, %v1084
        %1086 = vdwg.mxu0
        %1087 = vmatprep.subr.mxu0 0.0
        %1088 = vmatpush1.msra.mxu0 %v298
        %1089 = vmatprep.subr.mxu0 0.0
        %1090 = vmatpush1.msra.mxu0 %v301
        %1091 = vmatprep.subr.mxu0 0.0
        %1092 = vmatpush1.msra.mxu0 %v304
        %1093 = vmatprep.subr.mxu0 0.0
        %1094 = vmatpush1.msra.mxu0 0.0
        %1095 = vmatprep.subr.mxu0 0.0
        %1096 = vmatpush1.msra.mxu0 0.0
        %1097 = vmatprep.subr.mxu0 0.0
        %1098 = vmatpush1.msra.mxu0 0.0
        %1099 = vmatprep.subr.mxu0 0.0
        %1100 = vmatpush1.msra.mxu0 0.0
        %1101 = vmatprep.subr.mxu0 0.0
        %1102 = vmatpush1.msra.mxu0 0.0
        %1103 = vmatprep.subr.mxu0 0.0
        %1104 = vmatpush1.msra.mxu0 0.0
        %1105 = vmatprep.subr.mxu0 0.0
        %1106 = vmatpush1.msra.mxu0 0.0
        %1107 = vmatprep.subr.mxu0 0.0
        %1108 = vmatpush1.msra.mxu0 0.0
        %1109 = vmatprep.subr.mxu0 0.0
        %1110 = vmatpush1.msra.mxu0 0.0
        %1111 = vmatprep.subr.mxu0 0.0
        %1112 = vmatpush1.msra.mxu0 0.0
        %1113 = vmatprep.subr.mxu0 0.0
        %1114 = vmatpush1.msra.mxu0 0.0
        %1115 = vmatprep.subr.mxu0 0.0
        %1116 = vmatpush1.msra.mxu0 0.0
        %1117 = vmatprep.subr.mxu0 0.0
        %1118 = vmatpush1.msra.mxu0 0.0
        %1119 = vmatprep.subr.mxu0 0.0
        %1120 = vmatpush1.msra.mxu0 0.0
        %1121 = vmatprep.subr.mxu0 0.0
        %1122 = vmatpush1.msra.mxu0 0.0
        %1123 = vmatprep.subr.mxu0 0.0
        %1124 = vmatpush1.msra.mxu0 0.0
        %1125 = vmatprep.subr.mxu0 0.0
        %1126 = vmatpush1.msra.mxu0 0.0
        %1127 = vmatprep.subr.mxu0 0.0
        %1128 = vmatpush1.msra.mxu0 0.0
        %1129 = vmatprep.subr.mxu0 0.0
        %1130 = vmatpush1.msra.mxu0 0.0
        %1131 = vmatprep.subr.mxu0 0.0
        %1132 = vmatpush1.msra.mxu0 0.0
        %1133 = vmatprep.subr.mxu0 0.0
        %1134 = vmatpush1.msra.mxu0 0.0
        %1135 = vmatprep.subr.mxu0 0.0
        %1136 = vmatpush1.msra.mxu0 0.0
        %1137 = vmatprep.subr.mxu0 0.0
        %1138 = vmatpush1.msra.mxu0 0.0
        %1139 = vmatprep.subr.mxu0 0.0
        %1140 = vmatpush1.msra.mxu0 0.0
        %1141 = vmatprep.subr.mxu0 0.0
        %1142 = vmatpush1.msra.mxu0 0.0
        %1143 = vmatprep.subr.mxu0 0.0
        %1144 = vmatpush1.msra.mxu0 0.0
        %1145 = vmatprep.subr.mxu0 0.0
        %1146 = vmatpush1.msra.mxu0 0.0
        %1147 = vmatprep.subr.mxu0 0.0
        %1148 = vmatpush1.msra.mxu0 0.0
        %1149 = vmatprep.subr.mxu0 0.0
        %1150 = vmatpush1.msra.mxu0 0.0
        %1151 = vmatprep.mubr.f32.mxu0 0.0
        %1152 = vmatmul.mubr.f32.gmra.mrb[0].mxu0 %v1005
        %v1153 = vpop.f32.mrb[0].mxu0
        %v1154 = vadd.f32 %v996, %v1153
        %v1155 = vpop.f32.mrb[0].mxu0
        %1156 = vmatprep.mubr.f32.mxu0 0.0
        %1157 = vmatmul.mubr.f32.gmra.mrb[0].mxu0 %v1008
        %v1158 = vpop.f32.mrb[0].mxu0
        %v1159 = vadd.f32 %v1001, %v1158
        %v1160 = vpop.f32.mrb[0].mxu0
        %1161 = vdwg.mxu0
        %v1162 = vld [vmem:[%s288 + $0x1] sm:$0xff]
        %v1163 = vld [vmem:[%s288 + $0x9] sm:$0xf]
        %v1165 = vsel %vm318, %v1162, 0
        %v1168 = vsel %vm318, %v1163, 0
        %1170 = vmatprep.subr.mxu0 %v640
        %1171 = vmatpush1.msra.mxu0 %v639
        %1172 = vmatprep.subr.mxu0 %v643
        %1173 = vmatpush1.msra.mxu0 %v642
        %1174 = vmatprep.subr.mxu0 %v646
        %1175 = vmatpush1.msra.mxu0 %v645
        %1176 = vmatprep.subr.mxu0 0.0
        %1177 = vmatpush1.msra.mxu0 0.0
        %1178 = vmatprep.subr.mxu0 0.0
        %1179 = vmatpush1.msra.mxu0 0.0
        %1180 = vmatprep.subr.mxu0 0.0
        %1181 = vmatpush1.msra.mxu0 0.0
        %1182 = vmatprep.subr.mxu0 0.0
        %1183 = vmatpush1.msra.mxu0 0.0
        %1184 = vmatprep.subr.mxu0 0.0
        %1185 = vmatpush1.msra.mxu0 0.0
        %1186 = vmatprep.subr.mxu0 0.0
        %1187 = vmatpush1.msra.mxu0 0.0
        %1188 = vmatprep.subr.mxu0 0.0
        %1189 = vmatpush1.msra.mxu0 0.0
        %1190 = vmatprep.subr.mxu0 0.0
        %1191 = vmatpush1.msra.mxu0 0.0
        %1192 = vmatprep.subr.mxu0 0.0
        %1193 = vmatpush1.msra.mxu0 0.0
        %1194 = vmatprep.subr.mxu0 0.0
        %1195 = vmatpush1.msra.mxu0 0.0
        %1196 = vmatprep.subr.mxu0 0.0
        %1197 = vmatpush1.msra.mxu0 0.0
        %1198 = vmatprep.subr.mxu0 0.0
        %1199 = vmatpush1.msra.mxu0 0.0
        %1200 = vmatprep.subr.mxu0 0.0
        %1201 = vmatpush1.msra.mxu0 0.0
        %1202 = vmatprep.subr.mxu0 0.0
        %1203 = vmatpush1.msra.mxu0 0.0
        %1204 = vmatprep.subr.mxu0 0.0
        %1205 = vmatpush1.msra.mxu0 0.0
        %1206 = vmatprep.subr.mxu0 0.0
        %1207 = vmatpush1.msra.mxu0 0.0
        %1208 = vmatprep.subr.mxu0 0.0
        %1209 = vmatpush1.msra.mxu0 0.0
        %1210 = vmatprep.subr.mxu0 0.0
        %1211 = vmatpush1.msra.mxu0 0.0
        %1212 = vmatprep.subr.mxu0 0.0
        %1213 = vmatpush1.msra.mxu0 0.0
        %1214 = vmatprep.subr.mxu0 0.0
        %1215 = vmatpush1.msra.mxu0 0.0
        %1216 = vmatprep.subr.mxu0 0.0
        %1217 = vmatpush1.msra.mxu0 0.0
        %1218 = vmatprep.subr.mxu0 0.0
        %1219 = vmatpush1.msra.mxu0 0.0
        %1220 = vmatprep.subr.mxu0 0.0
        %1221 = vmatpush1.msra.mxu0 0.0
        %1222 = vmatprep.subr.mxu0 0.0
        %1223 = vmatpush1.msra.mxu0 0.0
        %1224 = vmatprep.subr.mxu0 0.0
        %1225 = vmatpush1.msra.mxu0 0.0
        %1226 = vmatprep.subr.mxu0 0.0
        %1227 = vmatpush1.msra.mxu0 0.0
        %1228 = vmatprep.subr.mxu0 0.0
        %1229 = vmatpush1.msra.mxu0 0.0
        %1230 = vmatprep.subr.mxu0 0.0
        %1231 = vmatpush1.msra.mxu0 0.0
        %1232 = vmatprep.subr.mxu0 0.0
        %1233 = vmatpush1.msra.mxu0 0.0
        %1234 = vmatprep.mubr.f32.mxu0 0.0
        %1235 = vmatmul.mubr.f32.gmra.mrb[0].mxu0 %v1165
        %v1236 = vpop.f32.mrb[0].mxu0
        %v1237 = vadd.f32 0.0, %v1236
        %v1238 = vpop.f32.mrb[0].mxu0
        %v1239 = vadd.f32 0.0, %v1238
        %1240 = vmatprep.mubr.f32.mxu0 0.0
        %1241 = vmatmul.mubr.f32.gmra.mrb[0].mxu0 %v1168
        %v1242 = vpop.f32.mrb[0].mxu0
        %v1243 = vadd.f32 0.0, %v1242
        %v1244 = vpop.f32.mrb[0].mxu0
        %v1245 = vadd.f32 0.0, %v1244
        %1246 = vdwg.mxu0
        %1247 = vmatprep.subr.mxu0 0.0
        %1248 = vmatpush1.msra.mxu0 %v641
        %1249 = vmatprep.subr.mxu0 0.0
        %1250 = vmatpush1.msra.mxu0 %v644
        %1251 = vmatprep.subr.mxu0 0.0
        %1252 = vmatpush1.msra.mxu0 %v647
        %1253 = vmatprep.subr.mxu0 0.0
        %1254 = vmatpush1.msra.mxu0 0.0
        %1255 = vmatprep.subr.mxu0 0.0
        %1256 = vmatpush1.msra.mxu0 0.0
        %1257 = vmatprep.subr.mxu0 0.0
        %1258 = vmatpush1.msra.mxu0 0.0
        %1259 = vmatprep.subr.mxu0 0.0
        %1260 = vmatpush1.msra.mxu0 0.0
        %1261 = vmatprep.subr.mxu0 0.0
        %1262 = vmatpush1.msra.mxu0 0.0
        %1263 = vmatprep.subr.mxu0 0.0
        %1264 = vmatpush1.msra.mxu0 0.0
        %1265 = vmatprep.subr.mxu0 0.0
        %1266 = vmatpush1.msra.mxu0 0.0
        %1267 = vmatprep.subr.mxu0 0.0
        %1268 = vmatpush1.msra.mxu0 0.0
        %1269 = vmatprep.subr.mxu0 0.0
        %1270 = vmatpush1.msra.mxu0 0.0
        %1271 = vmatprep.subr.mxu0 0.0
        %1272 = vmatpush1.msra.mxu0 0.0
        %1273 = vmatprep.subr.mxu0 0.0
        %1274 = vmatpush1.msra.mxu0 0.0
        %1275 = vmatprep.subr.mxu0 0.0
        %1276 = vmatpush1.msra.mxu0 0.0
        %1277 = vmatprep.subr.mxu0 0.0
        %1278 = vmatpush1.msra.mxu0 0.0
        %1279 = vmatprep.subr.mxu0 0.0
        %1280 = vmatpush1.msra.mxu0 0.0
        %1281 = vmatprep.subr.mxu0 0.0
        %1282 = vmatpush1.msra.mxu0 0.0
        %1283 = vmatprep.subr.mxu0 0.0
        %1284 = vmatpush1.msra.mxu0 0.0
        %1285 = vmatprep.subr.mxu0 0.0
        %1286 = vmatpush1.msra.mxu0 0.0
        %1287 = vmatprep.subr.mxu0 0.0
        %1288 = vmatpush1.msra.mxu0 0.0
        %1289 = vmatprep.subr.mxu0 0.0
        %1290 = vmatpush1.msra.mxu0 0.0
        %1291 = vmatprep.subr.mxu0 0.0
        %1292 = vmatpush1.msra.mxu0 0.0
        %1293 = vmatprep.subr.mxu0 0.0
        %1294 = vmatpush1.msra.mxu0 0.0
        %1295 = vmatprep.subr.mxu0 0.0
        %1296 = vmatpush1.msra.mxu0 0.0
        %1297 = vmatprep.subr.mxu0 0.0
        %1298 = vmatpush1.msra.mxu0 0.0
        %1299 = vmatprep.subr.mxu0 0.0
        %1300 = vmatpush1.msra.mxu0 0.0
        %1301 = vmatprep.subr.mxu0 0.0
        %1302 = vmatpush1.msra.mxu0 0.0
        %1303 = vmatprep.subr.mxu0 0.0
        %1304 = vmatpush1.msra.mxu0 0.0
        %1305 = vmatprep.subr.mxu0 0.0
        %1306 = vmatpush1.msra.mxu0 0.0
        %1307 = vmatprep.subr.mxu0 0.0
        %1308 = vmatpush1.msra.mxu0 0.0
        %1309 = vmatprep.subr.mxu0 0.0
        %1310 = vmatpush1.msra.mxu0 0.0
        %1311 = vmatprep.mubr.f32.mxu0 0.0
        %1312 = vmatmul.mubr.f32.gmra.mrb[0].mxu0 %v1165
        %v1313 = vpop.f32.mrb[0].mxu0
        %v1314 = vadd.f32 0.0, %v1313
        %v1315 = vpop.f32.mrb[0].mxu0
        %1316 = vmatprep.mubr.f32.mxu0 0.0
        %1317 = vmatmul.mubr.f32.gmra.mrb[0].mxu0 %v1168
        %v1318 = vpop.f32.mrb[0].mxu0
        %v1319 = vadd.f32 0.0, %v1318
        %v1320 = vpop.f32.mrb[0].mxu0
        %1321 = vdwg.mxu0
        %v1322 = vadd.f32 %v1077, %v1237
        %v1323 = vadd.f32 %v1079, %v1239
        %v1324 = vadd.f32 %v1154, %v1314
        %v1325 = vadd.f32 %v1083, %v1243
        %v1326 = vadd.f32 %v1085, %v1245
        %v1327 = vadd.f32 %v1159, %v1319
        %v1328 = vadd.f32 %v1322, %v817
        %v1329 = vadd.f32 %v1323, %v821
        %v1330 = vadd.f32 %v1324, %v825
        %v1331 = vadd.f32 %v1325, %v817
        %v1332 = vadd.f32 %v1326, %v821
        %v1333 = vadd.f32 %v1327, %v825
        %v1334 = vmax.f32 %v1328, 0.0
        %v1335 = vmax.f32 %v1329, 0.0
        %v1336 = vmax.f32 %v1330, 0.0
        %v1337 = vmax.f32 %v1331, 0.0
        %v1338 = vmax.f32 %v1332, 0.0
        %v1339 = vmax.f32 %v1333, 0.0
        %v1340 = vld [vmem:[#allocation2] sm:$0xff]
        %v1341 = vld [vmem:[#allocation2 + $0x8] sm:$0xff]
        %v1342 = vld [vmem:[#allocation2 + $0x10] sm:$0xff]
        %v1343 = vld [vmem:[#allocation2 + $0x18] sm:$0xff]
        %v1344 = vld [vmem:[#allocation2 + $0x20] sm:$0xff]
        %v1345 = vld [vmem:[#allocation2 + $0x28] sm:$0xff]
        %v1346 = vld [vmem:[#allocation2 + $0x30] sm:$0xff]
        %v1347 = vld [vmem:[#allocation2 + $0x38] sm:$0xff]
        %v1348 = vld [vmem:[#allocation2 + $0x40] sm:$0xff]
        %v1349 = vld [vmem:[#allocation2 + $0x48] sm:$0xff]
        %v1350 = vld [vmem:[#allocation2 + $0x50] sm:$0xff]
        %v1351 = vld [vmem:[#allocation2 + $0x58] sm:$0xff]
        %v1352 = vld [vmem:[#allocation2 + $0x60] sm:$0xff]
        %v1353 = vld [vmem:[#allocation2 + $0x68] sm:$0xff]
        %v1354 = vld [vmem:[#allocation2 + $0x70] sm:$0xff]
        %v1355 = vld [vmem:[#allocation2 + $0x78] sm:$0xff]
        %v1356 = vld [vmem:[#allocation2 + $0x80] sm:$0xff]
        %v1357 = vld [vmem:[#allocation2 + $0x88] sm:$0xff]
        %v1358 = vld [vmem:[#allocation2 + $0x90] sm:$0xff]
        %v1359 = vld [vmem:[#allocation2 + $0x98] sm:$0xff]
        %v1360 = vld [vmem:[#allocation2 + $0xa0] sm:$0xff]
        %v1361 = vld [vmem:[#allocation2 + $0xa8] sm:$0xff]
        %v1362 = vld [vmem:[#allocation2 + $0xb0] sm:$0xff]
        %v1363 = vld [vmem:[#allocation2 + $0xb8] sm:$0xff]
        %v1364 = vld [vmem:[#allocation2 + $0xc0] sm:$0xff]
        %v1365 = vld [vmem:[#allocation2 + $0xc8] sm:$0xff]
        %v1366 = vld [vmem:[#allocation2 + $0xd0] sm:$0xff]
        %v1367 = vld [vmem:[#allocation2 + $0xd8] sm:$0xff]
        %v1368 = vld [vmem:[#allocation2 + $0xe0] sm:$0xff]
        %v1369 = vld [vmem:[#allocation2 + $0xe8] sm:$0xff]
        %v1370 = vld [vmem:[#allocation2 + $0xf0] sm:$0xff]
        %v1371 = vld [vmem:[#allocation2 + $0xf8] sm:$0xff]
        %v1372 = vld [vmem:[#allocation2 + $0x100] sm:$0xff]
        %v1373 = vld [vmem:[#allocation2 + $0x108] sm:$0xff]
        %v1374 = vld [vmem:[#allocation2 + $0x110] sm:$0xff]
        %v1375 = vld [vmem:[#allocation2 + $0x118] sm:$0xff]
        %v1376 = vld [vmem:[#allocation2 + $0x120] sm:$0xff]
        %v1377 = vld [vmem:[#allocation2 + $0x128] sm:$0xff]
        %v1378 = vld [vmem:[#allocation2 + $0x130] sm:$0xff]
        %v1379 = vld [vmem:[#allocation2 + $0x138] sm:$0xff]
        %v1380 = vld [vmem:[#allocation2 + $0x140] sm:$0xff]
        %v1381 = vld [vmem:[#allocation2 + $0x148] sm:$0xff]
        %v1382 = vld [vmem:[#allocation2 + $0x150] sm:$0xff]
        %v1383 = vld [vmem:[#allocation2 + $0x158] sm:$0xff]
        %v1384 = vld [vmem:[#allocation2 + $0x160] sm:$0xff]
        %v1385 = vld [vmem:[#allocation2 + $0x168] sm:$0xff]
        %v1386 = vld [vmem:[#allocation2 + $0x170] sm:$0xff]
        %v1387 = vld [vmem:[#allocation2 + $0x178] sm:$0xff]
        %v1388 = vld [vmem:[#allocation2 + $0x180] sm:$0xff]
        %v1389 = vld [vmem:[#allocation2 + $0x188] sm:$0xff]
        %v1390 = vld [vmem:[#allocation2 + $0x190] sm:$0xff]
        %v1391 = vld [vmem:[#allocation2 + $0x198] sm:$0xff]
        %v1392 = vld [vmem:[#allocation2 + $0x1a0] sm:$0xff]
        %v1393 = vld [vmem:[#allocation2 + $0x1a8] sm:$0xff]
        %v1394 = vld [vmem:[#allocation2 + $0x1b0] sm:$0xff]
        %v1395 = vld [vmem:[#allocation2 + $0x1b8] sm:$0xff]
        %v1396 = vld [vmem:[#allocation2 + $0x1c0] sm:$0xff]
        %v1397 = vld [vmem:[#allocation2 + $0x1c8] sm:$0xff]
        %v1398 = vld [vmem:[#allocation2 + $0x1d0] sm:$0xff]
        %v1399 = vld [vmem:[#allocation2 + $0x1d8] sm:$0xff]
        %v1400 = vld [vmem:[#allocation2 + $0x1e0] sm:$0xff]
        %v1401 = vld [vmem:[#allocation2 + $0x1e8] sm:$0xff]
        %v1402 = vld [vmem:[#allocation2 + $0x1f0] sm:$0xff]
        %v1403 = vld [vmem:[#allocation2 + $0x1f8] sm:$0xff]
        %v1404 = vld [vmem:[#allocation2 + $0x200] sm:$0xff]
        %v1405 = vld [vmem:[#allocation2 + $0x208] sm:$0xff]
        %v1406 = vld [vmem:[#allocation2 + $0x210] sm:$0xff]
        %v1407 = vld [vmem:[#allocation2 + $0x218] sm:$0xff]
        %v1408 = vld [vmem:[#allocation2 + $0x220] sm:$0xff]
        %v1409 = vld [vmem:[#allocation2 + $0x228] sm:$0xff]
        %v1410 = vld [vmem:[#allocation2 + $0x230] sm:$0xff]
        %v1411 = vld [vmem:[#allocation2 + $0x238] sm:$0xff]
        %v1412 = vld [vmem:[#allocation2 + $0x240] sm:$0xff]
        %v1413 = vld [vmem:[#allocation2 + $0x248] sm:$0xff]
        %v1414 = vld [vmem:[#allocation2 + $0x250] sm:$0xff]
        %v1415 = vld [vmem:[#allocation2 + $0x258] sm:$0xff]
        %v1416 = vld [vmem:[#allocation2 + $0x260] sm:$0xff]
        %v1417 = vld [vmem:[#allocation2 + $0x268] sm:$0xff]
        %v1418 = vld [vmem:[#allocation2 + $0x270] sm:$0xff]
        %v1419 = vld [vmem:[#allocation2 + $0x278] sm:$0xff]
        %s1420 = scalar_lea.vmem [#allocation2], 640
        %v1421 = vld [vmem:[%s1420] sm:$0xff]
        %v1422 = vld [vmem:[%s1420 + $0x8] sm:$0xff]
        %v1423 = vld [vmem:[%s1420 + $0x10] sm:$0xff]
        %v1424 = vld [vmem:[%s1420 + $0x18] sm:$0xff]
        %v1425 = vld [vmem:[%s1420 + $0x20] sm:$0xff]
        %v1426 = vld [vmem:[%s1420 + $0x28] sm:$0xff]
        %v1427 = vld [vmem:[%s1420 + $0x30] sm:$0xff]
        %v1428 = vld [vmem:[%s1420 + $0x38] sm:$0xff]
        %v1429 = vld [vmem:[%s1420 + $0x40] sm:$0xff]
        %v1430 = vld [vmem:[%s1420 + $0x48] sm:$0xff]
        %v1431 = vld [vmem:[%s1420 + $0x50] sm:$0xff]
        %v1432 = vld [vmem:[%s1420 + $0x58] sm:$0xff]
        %v1433 = vld [vmem:[%s1420 + $0x60] sm:$0xff]
        %v1434 = vld [vmem:[%s1420 + $0x68] sm:$0xff]
        %v1435 = vld [vmem:[%s1420 + $0x70] sm:$0xff]
        %v1436 = vld [vmem:[%s1420 + $0x78] sm:$0xff]
        %v1437 = vld [vmem:[%s1420 + $0x80] sm:$0xff]
        %v1438 = vld [vmem:[%s1420 + $0x88] sm:$0xff]
        %v1439 = vld [vmem:[%s1420 + $0x90] sm:$0xff]
        %v1440 = vld [vmem:[%s1420 + $0x98] sm:$0xff]
        %v1441 = vld [vmem:[%s1420 + $0xa0] sm:$0xff]
        %v1442 = vld [vmem:[%s1420 + $0xa8] sm:$0xff]
        %v1443 = vld [vmem:[%s1420 + $0xb0] sm:$0xff]
        %v1444 = vld [vmem:[%s1420 + $0xb8] sm:$0xff]
        %v1445 = vld [vmem:[%s1420 + $0xc0] sm:$0xff]
        %v1446 = vld [vmem:[%s1420 + $0xc8] sm:$0xff]
        %v1447 = vld [vmem:[%s1420 + $0xd0] sm:$0xff]
        %v1448 = vld [vmem:[%s1420 + $0xd8] sm:$0xff]
        %v1449 = vld [vmem:[%s1420 + $0xe0] sm:$0xff]
        %v1450 = vld [vmem:[%s1420 + $0xe8] sm:$0xff]
        %v1451 = vld [vmem:[%s1420 + $0xf0] sm:$0xff]
        %v1452 = vld [vmem:[%s1420 + $0xf8] sm:$0xff]
        %v1453 = vld [vmem:[%s1420 + $0x100] sm:$0xff]
        %v1454 = vld [vmem:[%s1420 + $0x108] sm:$0xff]
        %v1455 = vld [vmem:[%s1420 + $0x110] sm:$0xff]
        %v1456 = vld [vmem:[%s1420 + $0x118] sm:$0xff]
        %v1457 = vld [vmem:[%s1420 + $0x120] sm:$0xff]
        %v1458 = vld [vmem:[%s1420 + $0x128] sm:$0xff]
        %v1459 = vld [vmem:[%s1420 + $0x130] sm:$0xff]
        %v1460 = vld [vmem:[%s1420 + $0x138] sm:$0xff]
        %v1461 = vld [vmem:[%s1420 + $0x140] sm:$0xff]
        %v1462 = vld [vmem:[%s1420 + $0x148] sm:$0xff]
        %v1463 = vld [vmem:[%s1420 + $0x150] sm:$0xff]
        %v1464 = vld [vmem:[%s1420 + $0x158] sm:$0xff]
        %v1465 = vld [vmem:[%s1420 + $0x160] sm:$0xff]
        %v1466 = vld [vmem:[%s1420 + $0x168] sm:$0xff]
        %v1467 = vld [vmem:[%s1420 + $0x170] sm:$0xff]
        %v1468 = vld [vmem:[%s1420 + $0x178] sm:$0xff]
        %v1469 = vld [vmem:[%s1420 + $0x180] sm:$0xff]
        %v1470 = vld [vmem:[%s1420 + $0x188] sm:$0xff]
        %v1471 = vld [vmem:[%s1420 + $0x190] sm:$0xff]
        %v1472 = vld [vmem:[%s1420 + $0x198] sm:$0xff]
        %v1473 = vld [vmem:[%s1420 + $0x1a0] sm:$0xff]
        %v1474 = vld [vmem:[%s1420 + $0x1a8] sm:$0xff]
        %v1475 = vld [vmem:[%s1420 + $0x1b0] sm:$0xff]
        %v1476 = vld [vmem:[%s1420 + $0x1b8] sm:$0xff]
        %v1477 = vld [vmem:[%s1420 + $0x1c0] sm:$0xff]
        %v1478 = vld [vmem:[%s1420 + $0x1c8] sm:$0xff]
        %v1479 = vld [vmem:[%s1420 + $0x1d0] sm:$0xff]
        %v1480 = vld [vmem:[%s1420 + $0x1d8] sm:$0xff]
        %v1481 = vld [vmem:[%s1420 + $0x1e0] sm:$0xff]
        %v1482 = vld [vmem:[%s1420 + $0x1e8] sm:$0xff]
        %v1483 = vld [vmem:[%s1420 + $0x1f0] sm:$0xff]
        %v1484 = vld [vmem:[%s1420 + $0x1f8] sm:$0xff]
        %v1485 = vld [vmem:[%s1420 + $0x200] sm:$0xff]
        %v1486 = vld [vmem:[%s1420 + $0x208] sm:$0xff]
        %v1487 = vld [vmem:[%s1420 + $0x210] sm:$0xff]
        %v1488 = vld [vmem:[%s1420 + $0x218] sm:$0xff]
        %v1489 = vld [vmem:[%s1420 + $0x220] sm:$0xff]
        %v1490 = vld [vmem:[%s1420 + $0x228] sm:$0xff]
        %v1491 = vld [vmem:[%s1420 + $0x230] sm:$0xff]
        %v1492 = vld [vmem:[%s1420 + $0x238] sm:$0xff]
        %v1493 = vld [vmem:[%s1420 + $0x240] sm:$0xff]
        %v1494 = vld [vmem:[%s1420 + $0x248] sm:$0xff]
        %v1495 = vld [vmem:[%s1420 + $0x250] sm:$0xff]
        %v1496 = vld [vmem:[%s1420 + $0x258] sm:$0xff]
        %v1497 = vld [vmem:[%s1420 + $0x260] sm:$0xff]
        %v1498 = vld [vmem:[%s1420 + $0x268] sm:$0xff]
        %v1499 = vld [vmem:[%s1420 + $0x270] sm:$0xff]
        %v1500 = vld [vmem:[%s1420 + $0x278] sm:$0xff]
        %vm1501 = vcmask 523264
        %v1503 = vsel %vm1501, %v1336, 0
        %v1506 = vsel %vm1501, %v1339, 0
        %1508 = vmatprep.subr.mxu0 %v1422
        %1509 = vmatpush1.msra.mxu0 %v1421
        %1510 = vmatprep.subr.mxu0 %v1424
        %1511 = vmatpush1.msra.mxu0 %v1423
        %1512 = vmatprep.subr.mxu0 %v1426
        %1513 = vmatpush1.msra.mxu0 %v1425
        %1514 = vmatprep.subr.mxu0 %v1428
        %1515 = vmatpush1.msra.mxu0 %v1427
        %1516 = vmatprep.subr.mxu0 %v1430
        %1517 = vmatpush1.msra.mxu0 %v1429
        %1518 = vmatprep.subr.mxu0 %v1432
        %1519 = vmatpush1.msra.mxu0 %v1431
        %1520 = vmatprep.subr.mxu0 %v1434
        %1521 = vmatpush1.msra.mxu0 %v1433
        %1522 = vmatprep.subr.mxu0 %v1436
        %1523 = vmatpush1.msra.mxu0 %v1435
        %1524 = vmatprep.subr.mxu0 %v1438
        %1525 = vmatpush1.msra.mxu0 %v1437
        %1526 = vmatprep.subr.mxu0 %v1440
        %1527 = vmatpush1.msra.mxu0 %v1439
        %1528 = vmatprep.subr.mxu0 %v1442
        %1529 = vmatpush1.msra.mxu0 %v1441
        %1530 = vmatprep.subr.mxu0 %v1444
        %1531 = vmatpush1.msra.mxu0 %v1443
        %1532 = vmatprep.subr.mxu0 %v1446
        %1533 = vmatpush1.msra.mxu0 %v1445
        %1534 = vmatprep.subr.mxu0 %v1448
        %1535 = vmatpush1.msra.mxu0 %v1447
        %1536 = vmatprep.subr.mxu0 %v1450
        %1537 = vmatpush1.msra.mxu0 %v1449
        %1538 = vmatprep.subr.mxu0 %v1452
        %1539 = vmatpush1.msra.mxu0 %v1451
        %1540 = vmatprep.subr.mxu0 %v1454
        %1541 = vmatpush1.msra.mxu0 %v1453
        %1542 = vmatprep.subr.mxu0 %v1456
        %1543 = vmatpush1.msra.mxu0 %v1455
        %1544 = vmatprep.subr.mxu0 %v1458
        %1545 = vmatpush1.msra.mxu0 %v1457
        %1546 = vmatprep.subr.mxu0 %v1460
        %1547 = vmatpush1.msra.mxu0 %v1459
        %1548 = vmatprep.subr.mxu0 %v1462
        %1549 = vmatpush1.msra.mxu0 %v1461
        %1550 = vmatprep.subr.mxu0 %v1464
        %1551 = vmatpush1.msra.mxu0 %v1463
        %1552 = vmatprep.subr.mxu0 %v1466
        %1553 = vmatpush1.msra.mxu0 %v1465
        %1554 = vmatprep.subr.mxu0 %v1468
        %1555 = vmatpush1.msra.mxu0 %v1467
        %1556 = vmatprep.subr.mxu0 %v1470
        %1557 = vmatpush1.msra.mxu0 %v1469
        %1558 = vmatprep.subr.mxu0 %v1472
        %1559 = vmatpush1.msra.mxu0 %v1471
        %1560 = vmatprep.subr.mxu0 %v1474
        %1561 = vmatpush1.msra.mxu0 %v1473
        %1562 = vmatprep.subr.mxu0 %v1476
        %1563 = vmatpush1.msra.mxu0 %v1475
        %1564 = vmatprep.subr.mxu0 %v1478
        %1565 = vmatpush1.msra.mxu0 %v1477
        %1566 = vmatprep.subr.mxu0 %v1480
        %1567 = vmatpush1.msra.mxu0 %v1479
        %1568 = vmatprep.subr.mxu0 %v1482
        %1569 = vmatpush1.msra.mxu0 %v1481
        %1570 = vmatprep.subr.mxu0 %v1484
        %1571 = vmatpush1.msra.mxu0 %v1483
        %1572 = vmatprep.mubr.f32.mxu0 %v1335
        %1573 = vmatmul.mubr.f32.gmra.mrb[0].mxu0 %v1334
        %v1574 = vpop.f32.mrb[0].mxu0
        %v1575 = vadd.f32 0.0, %v1574
        %v1576 = vpop.f32.mrb[0].mxu0
        %v1577 = vadd.f32 0.0, %v1576
        %1578 = vmatprep.mubr.f32.mxu0 %v1338
        %1579 = vmatmul.mubr.f32.gmra.mrb[0].mxu0 %v1337
        %v1580 = vpop.f32.mrb[0].mxu0
        %v1581 = vadd.f32 0.0, %v1580
        %v1582 = vpop.f32.mrb[0].mxu0
        %v1583 = vadd.f32 0.0, %v1582
        %1584 = vdwg.mxu0
        %1585 = vmatprep.subr.mxu0 %v1486
        %1586 = vmatpush1.msra.mxu0 %v1485
        %1587 = vmatprep.subr.mxu0 %v1488
        %1588 = vmatpush1.msra.mxu0 %v1487
        %1589 = vmatprep.subr.mxu0 %v1490
        %1590 = vmatpush1.msra.mxu0 %v1489
        %1591 = vmatprep.subr.mxu0 %v1492
        %1592 = vmatpush1.msra.mxu0 %v1491
        %1593 = vmatprep.subr.mxu0 %v1494
        %1594 = vmatpush1.msra.mxu0 %v1493
        %1595 = vmatprep.subr.mxu0 %v1496
        %1596 = vmatpush1.msra.mxu0 %v1495
        %1597 = vmatprep.subr.mxu0 %v1498
        %1598 = vmatpush1.msra.mxu0 %v1497
        %1599 = vmatprep.subr.mxu0 %v1500
        %1600 = vmatpush1.msra.mxu0 %v1499
        %1601 = vmatprep.subr.mxu0 0.0
        %1602 = vmatpush1.msra.mxu0 0.0
        %1603 = vmatprep.subr.mxu0 0.0
        %1604 = vmatpush1.msra.mxu0 0.0
        %1605 = vmatprep.subr.mxu0 0.0
        %1606 = vmatpush1.msra.mxu0 0.0
        %1607 = vmatprep.subr.mxu0 0.0
        %1608 = vmatpush1.msra.mxu0 0.0
        %1609 = vmatprep.subr.mxu0 0.0
        %1610 = vmatpush1.msra.mxu0 0.0
        %1611 = vmatprep.subr.mxu0 0.0
        %1612 = vmatpush1.msra.mxu0 0.0
        %1613 = vmatprep.subr.mxu0 0.0
        %1614 = vmatpush1.msra.mxu0 0.0
        %1615 = vmatprep.subr.mxu0 0.0
        %1616 = vmatpush1.msra.mxu0 0.0
        %1617 = vmatprep.subr.mxu0 0.0
        %1618 = vmatpush1.msra.mxu0 0.0
        %1619 = vmatprep.subr.mxu0 0.0
        %1620 = vmatpush1.msra.mxu0 0.0
        %1621 = vmatprep.subr.mxu0 0.0
        %1622 = vmatpush1.msra.mxu0 0.0
        %1623 = vmatprep.subr.mxu0 0.0
        %1624 = vmatpush1.msra.mxu0 0.0
        %1625 = vmatprep.subr.mxu0 0.0
        %1626 = vmatpush1.msra.mxu0 0.0
        %1627 = vmatprep.subr.mxu0 0.0
        %1628 = vmatpush1.msra.mxu0 0.0
        %1629 = vmatprep.subr.mxu0 0.0
        %1630 = vmatpush1.msra.mxu0 0.0
        %1631 = vmatprep.subr.mxu0 0.0
        %1632 = vmatpush1.msra.mxu0 0.0
        %1633 = vmatprep.subr.mxu0 0.0
        %1634 = vmatpush1.msra.mxu0 0.0
        %1635 = vmatprep.subr.mxu0 0.0
        %1636 = vmatpush1.msra.mxu0 0.0
        %1637 = vmatprep.subr.mxu0 0.0
        %1638 = vmatpush1.msra.mxu0 0.0
        %1639 = vmatprep.subr.mxu0 0.0
        %1640 = vmatpush1.msra.mxu0 0.0
        %1641 = vmatprep.subr.mxu0 0.0
        %1642 = vmatpush1.msra.mxu0 0.0
        %1643 = vmatprep.subr.mxu0 0.0
        %1644 = vmatpush1.msra.mxu0 0.0
        %1645 = vmatprep.subr.mxu0 0.0
        %1646 = vmatpush1.msra.mxu0 0.0
        %1647 = vmatprep.subr.mxu0 0.0
        %1648 = vmatpush1.msra.mxu0 0.0
        %1649 = vmatprep.mubr.f32.mxu0 0.0
        %1650 = vmatmul.mubr.f32.gmra.mrb[0].mxu0 %v1503
        %v1651 = vpop.f32.mrb[0].mxu0
        %v1652 = vadd.f32 %v1575, %v1651
        %v1653 = vpop.f32.mrb[0].mxu0
        %v1654 = vadd.f32 %v1577, %v1653
        %1655 = vmatprep.mubr.f32.mxu0 0.0
        %1656 = vmatmul.mubr.f32.gmra.mrb[0].mxu0 %v1506
        %v1657 = vpop.f32.mrb[0].mxu0
        %v1658 = vadd.f32 %v1581, %v1657
        %v1659 = vpop.f32.mrb[0].mxu0
        %v1660 = vadd.f32 %v1583, %v1659
        %1661 = vdwg.mxu0
        %v1663 = vsel %vm1501, %v837, 0
        %v1666 = vsel %vm1501, %v840, 0
        %1668 = vmatprep.subr.mxu0 %v1341
        %1669 = vmatpush1.msra.mxu0 %v1340
        %1670 = vmatprep.subr.mxu0 %v1343
        %1671 = vmatpush1.msra.mxu0 %v1342
        %1672 = vmatprep.subr.mxu0 %v1345
        %1673 = vmatpush1.msra.mxu0 %v1344
        %1674 = vmatprep.subr.mxu0 %v1347
        %1675 = vmatpush1.msra.mxu0 %v1346
        %1676 = vmatprep.subr.mxu0 %v1349
        %1677 = vmatpush1.msra.mxu0 %v1348
        %1678 = vmatprep.subr.mxu0 %v1351
        %1679 = vmatpush1.msra.mxu0 %v1350
        %1680 = vmatprep.subr.mxu0 %v1353
        %1681 = vmatpush1.msra.mxu0 %v1352
        %1682 = vmatprep.subr.mxu0 %v1355
        %1683 = vmatpush1.msra.mxu0 %v1354
        %1684 = vmatprep.subr.mxu0 %v1357
        %1685 = vmatpush1.msra.mxu0 %v1356
        %1686 = vmatprep.subr.mxu0 %v1359
        %1687 = vmatpush1.msra.mxu0 %v1358
        %1688 = vmatprep.subr.mxu0 %v1361
        %1689 = vmatpush1.msra.mxu0 %v1360
        %1690 = vmatprep.subr.mxu0 %v1363
        %1691 = vmatpush1.msra.mxu0 %v1362
        %1692 = vmatprep.subr.mxu0 %v1365
        %1693 = vmatpush1.msra.mxu0 %v1364
        %1694 = vmatprep.subr.mxu0 %v1367
        %1695 = vmatpush1.msra.mxu0 %v1366
        %1696 = vmatprep.subr.mxu0 %v1369
        %1697 = vmatpush1.msra.mxu0 %v1368
        %1698 = vmatprep.subr.mxu0 %v1371
        %1699 = vmatpush1.msra.mxu0 %v1370
        %1700 = vmatprep.subr.mxu0 %v1373
        %1701 = vmatpush1.msra.mxu0 %v1372
        %1702 = vmatprep.subr.mxu0 %v1375
        %1703 = vmatpush1.msra.mxu0 %v1374
        %1704 = vmatprep.subr.mxu0 %v1377
        %1705 = vmatpush1.msra.mxu0 %v1376
        %1706 = vmatprep.subr.mxu0 %v1379
        %1707 = vmatpush1.msra.mxu0 %v1378
        %1708 = vmatprep.subr.mxu0 %v1381
        %1709 = vmatpush1.msra.mxu0 %v1380
        %1710 = vmatprep.subr.mxu0 %v1383
        %1711 = vmatpush1.msra.mxu0 %v1382
        %1712 = vmatprep.subr.mxu0 %v1385
        %1713 = vmatpush1.msra.mxu0 %v1384
        %1714 = vmatprep.subr.mxu0 %v1387
        %1715 = vmatpush1.msra.mxu0 %v1386
        %1716 = vmatprep.subr.mxu0 %v1389
        %1717 = vmatpush1.msra.mxu0 %v1388
        %1718 = vmatprep.subr.mxu0 %v1391
        %1719 = vmatpush1.msra.mxu0 %v1390
        %1720 = vmatprep.subr.mxu0 %v1393
        %1721 = vmatpush1.msra.mxu0 %v1392
        %1722 = vmatprep.subr.mxu0 %v1395
        %1723 = vmatpush1.msra.mxu0 %v1394
        %1724 = vmatprep.subr.mxu0 %v1397
        %1725 = vmatpush1.msra.mxu0 %v1396
        %1726 = vmatprep.subr.mxu0 %v1399
        %1727 = vmatpush1.msra.mxu0 %v1398
        %1728 = vmatprep.subr.mxu0 %v1401
        %1729 = vmatpush1.msra.mxu0 %v1400
        %1730 = vmatprep.subr.mxu0 %v1403
        %1731 = vmatpush1.msra.mxu0 %v1402
        %1732 = vmatprep.mubr.f32.mxu0 %v836
        %1733 = vmatmul.mubr.f32.gmra.mrb[0].mxu0 %v835
        %v1734 = vpop.f32.mrb[0].mxu0
        %v1735 = vadd.f32 %v1652, %v1734
        %v1736 = vpop.f32.mrb[0].mxu0
        %v1737 = vadd.f32 %v1654, %v1736
        %1738 = vmatprep.mubr.f32.mxu0 %v839
        %1739 = vmatmul.mubr.f32.gmra.mrb[0].mxu0 %v838
        %v1740 = vpop.f32.mrb[0].mxu0
        %v1741 = vadd.f32 %v1658, %v1740
        %v1742 = vpop.f32.mrb[0].mxu0
        %v1743 = vadd.f32 %v1660, %v1742
        %1744 = vdwg.mxu0
        %1745 = vmatprep.subr.mxu0 %v1405
        %1746 = vmatpush1.msra.mxu0 %v1404
        %1747 = vmatprep.subr.mxu0 %v1407
        %1748 = vmatpush1.msra.mxu0 %v1406
        %1749 = vmatprep.subr.mxu0 %v1409
        %1750 = vmatpush1.msra.mxu0 %v1408
        %1751 = vmatprep.subr.mxu0 %v1411
        %1752 = vmatpush1.msra.mxu0 %v1410
        %1753 = vmatprep.subr.mxu0 %v1413
        %1754 = vmatpush1.msra.mxu0 %v1412
        %1755 = vmatprep.subr.mxu0 %v1415
        %1756 = vmatpush1.msra.mxu0 %v1414
        %1757 = vmatprep.subr.mxu0 %v1417
        %1758 = vmatpush1.msra.mxu0 %v1416
        %1759 = vmatprep.subr.mxu0 %v1419
        %1760 = vmatpush1.msra.mxu0 %v1418
        %1761 = vmatprep.subr.mxu0 0.0
        %1762 = vmatpush1.msra.mxu0 0.0
        %1763 = vmatprep.subr.mxu0 0.0
        %1764 = vmatpush1.msra.mxu0 0.0
        %1765 = vmatprep.subr.mxu0 0.0
        %1766 = vmatpush1.msra.mxu0 0.0
        %1767 = vmatprep.subr.mxu0 0.0
        %1768 = vmatpush1.msra.mxu0 0.0
        %1769 = vmatprep.subr.mxu0 0.0
        %1770 = vmatpush1.msra.mxu0 0.0
        %1771 = vmatprep.subr.mxu0 0.0
        %1772 = vmatpush1.msra.mxu0 0.0
        %1773 = vmatprep.subr.mxu0 0.0
        %1774 = vmatpush1.msra.mxu0 0.0
        %1775 = vmatprep.subr.mxu0 0.0
        %1776 = vmatpush1.msra.mxu0 0.0
        %1777 = vmatprep.subr.mxu0 0.0
        %1778 = vmatpush1.msra.mxu0 0.0
        %1779 = vmatprep.subr.mxu0 0.0
        %1780 = vmatpush1.msra.mxu0 0.0
        %1781 = vmatprep.subr.mxu0 0.0
        %1782 = vmatpush1.msra.mxu0 0.0
        %1783 = vmatprep.subr.mxu0 0.0
        %1784 = vmatpush1.msra.mxu0 0.0
        %1785 = vmatprep.subr.mxu0 0.0
        %1786 = vmatpush1.msra.mxu0 0.0
        %1787 = vmatprep.subr.mxu0 0.0
        %1788 = vmatpush1.msra.mxu0 0.0
        %1789 = vmatprep.subr.mxu0 0.0
        %1790 = vmatpush1.msra.mxu0 0.0
        %1791 = vmatprep.subr.mxu0 0.0
        %1792 = vmatpush1.msra.mxu0 0.0
        %1793 = vmatprep.subr.mxu0 0.0
        %1794 = vmatpush1.msra.mxu0 0.0
        %1795 = vmatprep.subr.mxu0 0.0
        %1796 = vmatpush1.msra.mxu0 0.0
        %1797 = vmatprep.subr.mxu0 0.0
        %1798 = vmatpush1.msra.mxu0 0.0
        %1799 = vmatprep.subr.mxu0 0.0
        %1800 = vmatpush1.msra.mxu0 0.0
        %1801 = vmatprep.subr.mxu0 0.0
        %1802 = vmatpush1.msra.mxu0 0.0
        %1803 = vmatprep.subr.mxu0 0.0
        %1804 = vmatpush1.msra.mxu0 0.0
        %1805 = vmatprep.subr.mxu0 0.0
        %1806 = vmatpush1.msra.mxu0 0.0
        %1807 = vmatprep.subr.mxu0 0.0
        %1808 = vmatpush1.msra.mxu0 0.0
        %1809 = vmatprep.mubr.f32.mxu0 0.0
        %1810 = vmatmul.mubr.f32.gmra.mrb[0].mxu0 %v1663
        %v1811 = vpop.f32.mrb[0].mxu0
        %v1812 = vadd.f32 %v1735, %v1811
        %v1813 = vpop.f32.mrb[0].mxu0
        %v1814 = vadd.f32 %v1737, %v1813
        %1815 = vmatprep.mubr.f32.mxu0 0.0
        %1816 = vmatmul.mubr.f32.gmra.mrb[0].mxu0 %v1666
        %v1817 = vpop.f32.mrb[0].mxu0
        %v1818 = vadd.f32 %v1741, %v1817
        %v1819 = vpop.f32.mrb[0].mxu0
        %v1820 = vadd.f32 %v1743, %v1819
        %1821 = vdwg.mxu0
        %s1822 = scalar_lea.vmem [#allocation2], 1280
        %v1823 = vld [vmem:[%s1822] sm:$0xff]
        %v1824 = vld [vmem:[%s1822 + $0x8] sm:$0xff]
        %v1825 = vld [vmem:[%s1822 + $0x10] sm:$0xff]
        %v1826 = vld [vmem:[%s1822 + $0x18] sm:$0xff]
        %v1827 = vld [vmem:[%s1822 + $0x20] sm:$0xff]
        %v1828 = vld [vmem:[%s1822 + $0x28] sm:$0xff]
        %v1829 = vld [vmem:[%s1822 + $0x30] sm:$0xff]
        %v1830 = vld [vmem:[%s1822 + $0x38] sm:$0xff]
        %v1831 = vld [vmem:[%s1822 + $0x40] sm:$0xff]
        %v1832 = vld [vmem:[%s1822 + $0x48] sm:$0xff]
        %v1833 = vld [vmem:[%s1822 + $0x50] sm:$0xff]
        %v1834 = vld [vmem:[%s1822 + $0x58] sm:$0xff]
        %v1835 = vld [vmem:[%s1822 + $0x60] sm:$0xff]
        %v1836 = vld [vmem:[%s1822 + $0x68] sm:$0xff]
        %v1837 = vld [vmem:[%s1822 + $0x70] sm:$0xff]
        %v1838 = vld [vmem:[%s1822 + $0x78] sm:$0xff]
        %v1839 = vld [vmem:[%s1822 + $0x80] sm:$0xff]
        %v1840 = vld [vmem:[%s1822 + $0x88] sm:$0xff]
        %v1841 = vld [vmem:[%s1822 + $0x90] sm:$0xff]
        %v1842 = vld [vmem:[%s1822 + $0x98] sm:$0xff]
        %v1843 = vld [vmem:[%s1822 + $0xa0] sm:$0xff]
        %v1844 = vld [vmem:[%s1822 + $0xa8] sm:$0xff]
        %v1845 = vld [vmem:[%s1822 + $0xb0] sm:$0xff]
        %v1846 = vld [vmem:[%s1822 + $0xb8] sm:$0xff]
        %v1847 = vld [vmem:[%s1822 + $0xc0] sm:$0xff]
        %v1848 = vld [vmem:[%s1822 + $0xc8] sm:$0xff]
        %v1849 = vld [vmem:[%s1822 + $0xd0] sm:$0xff]
        %v1850 = vld [vmem:[%s1822 + $0xd8] sm:$0xff]
        %v1851 = vld [vmem:[%s1822 + $0xe0] sm:$0xff]
        %v1852 = vld [vmem:[%s1822 + $0xe8] sm:$0xff]
        %v1853 = vld [vmem:[%s1822 + $0xf0] sm:$0xff]
        %v1854 = vld [vmem:[%s1822 + $0xf8] sm:$0xff]
        %v1855 = vld [vmem:[%s1822 + $0x100] sm:$0xff]
        %v1856 = vld [vmem:[%s1822 + $0x108] sm:$0xff]
        %v1857 = vld [vmem:[%s1822 + $0x110] sm:$0xff]
        %v1858 = vld [vmem:[%s1822 + $0x118] sm:$0xff]
        %v1859 = vld [vmem:[%s1822 + $0x120] sm:$0xff]
        %v1860 = vld [vmem:[%s1822 + $0x128] sm:$0xff]
        %v1861 = vld [vmem:[%s1822 + $0x130] sm:$0xff]
        %v1862 = vld [vmem:[%s1822 + $0x138] sm:$0xff]
        %v1863 = vld [vmem:[%s1822 + $0x140] sm:$0xff]
        %v1864 = vld [vmem:[%s1822 + $0x148] sm:$0xff]
        %v1865 = vld [vmem:[%s1822 + $0x150] sm:$0xff]
        %v1866 = vld [vmem:[%s1822 + $0x158] sm:$0xff]
        %v1867 = vld [vmem:[%s1822 + $0x160] sm:$0xff]
        %v1868 = vld [vmem:[%s1822 + $0x168] sm:$0xff]
        %v1869 = vld [vmem:[%s1822 + $0x170] sm:$0xff]
        %v1870 = vld [vmem:[%s1822 + $0x178] sm:$0xff]
        %v1871 = vld [vmem:[%s1822 + $0x180] sm:$0xff]
        %v1872 = vld [vmem:[%s1822 + $0x188] sm:$0xff]
        %v1873 = vld [vmem:[%s1822 + $0x190] sm:$0xff]
        %v1874 = vld [vmem:[%s1822 + $0x198] sm:$0xff]
        %v1875 = vld [vmem:[%s1822 + $0x1a0] sm:$0xff]
        %v1876 = vld [vmem:[%s1822 + $0x1a8] sm:$0xff]
        %v1877 = vld [vmem:[%s1822 + $0x1b0] sm:$0xff]
        %v1878 = vld [vmem:[%s1822 + $0x1b8] sm:$0xff]
        %v1879 = vld [vmem:[%s1822 + $0x1c0] sm:$0xff]
        %v1880 = vld [vmem:[%s1822 + $0x1c8] sm:$0xff]
        %v1881 = vld [vmem:[%s1822 + $0x1d0] sm:$0xff]
        %v1882 = vld [vmem:[%s1822 + $0x1d8] sm:$0xff]
        %v1883 = vld [vmem:[%s1822 + $0x1e0] sm:$0xff]
        %v1884 = vld [vmem:[%s1822 + $0x1e8] sm:$0xff]
        %v1885 = vld [vmem:[%s1822 + $0x1f0] sm:$0xff]
        %v1886 = vld [vmem:[%s1822 + $0x1f8] sm:$0xff]
        %v1887 = vld [vmem:[%s1822 + $0x200] sm:$0xff]
        %v1888 = vld [vmem:[%s1822 + $0x208] sm:$0xff]
        %v1889 = vld [vmem:[%s1822 + $0x210] sm:$0xff]
        %v1890 = vld [vmem:[%s1822 + $0x218] sm:$0xff]
        %v1891 = vld [vmem:[%s1822 + $0x220] sm:$0xff]
        %v1892 = vld [vmem:[%s1822 + $0x228] sm:$0xff]
        %v1893 = vld [vmem:[%s1822 + $0x230] sm:$0xff]
        %v1894 = vld [vmem:[%s1822 + $0x238] sm:$0xff]
        %v1895 = vld [vmem:[%s1822 + $0x240] sm:$0xff]
        %v1896 = vld [vmem:[%s1822 + $0x248] sm:$0xff]
        %v1897 = vld [vmem:[%s1822 + $0x250] sm:$0xff]
        %v1898 = vld [vmem:[%s1822 + $0x258] sm:$0xff]
        %v1899 = vld [vmem:[%s1822 + $0x260] sm:$0xff]
        %v1900 = vld [vmem:[%s1822 + $0x268] sm:$0xff]
        %v1901 = vld [vmem:[%s1822 + $0x270] sm:$0xff]
        %v1902 = vld [vmem:[%s1822 + $0x278] sm:$0xff]
        %vm1907 = vcmask 1046528
        %v1908 = vrot.slane %v835, 1
        %v1909 = vrot.slane %v838, 1
        %v1910 = vsel %vm1907, %v1908, %v1909
        %v1911 = vrot.slane %v836, 1
        %v1912 = vrot.slane %v839, 1
        %v1913 = vsel %vm1907, %v1911, %v1912
        %v1914 = vrot.slane %v837, 1
        %v1915 = vrot.slane %v840, 1
        %v1916 = vsel %vm1907, %v1914, %v1915
        %v1921 = vsel %vm1501, %v1916, 0
        %v1923 = vsel %vm1501, %v1915, 0
        %1925 = vmatprep.subr.mxu0 %v1824
        %1926 = vmatpush1.msra.mxu0 %v1823
        %1927 = vmatprep.subr.mxu0 %v1826
        %1928 = vmatpush1.msra.mxu0 %v1825
        %1929 = vmatprep.subr.mxu0 %v1828
        %1930 = vmatpush1.msra.mxu0 %v1827
        %1931 = vmatprep.subr.mxu0 %v1830
        %1932 = vmatpush1.msra.mxu0 %v1829
        %1933 = vmatprep.subr.mxu0 %v1832
        %1934 = vmatpush1.msra.mxu0 %v1831
        %1935 = vmatprep.subr.mxu0 %v1834
        %1936 = vmatpush1.msra.mxu0 %v1833
        %1937 = vmatprep.subr.mxu0 %v1836
        %1938 = vmatpush1.msra.mxu0 %v1835
        %1939 = vmatprep.subr.mxu0 %v1838
        %1940 = vmatpush1.msra.mxu0 %v1837
        %1941 = vmatprep.subr.mxu0 %v1840
        %1942 = vmatpush1.msra.mxu0 %v1839
        %1943 = vmatprep.subr.mxu0 %v1842
        %1944 = vmatpush1.msra.mxu0 %v1841
        %1945 = vmatprep.subr.mxu0 %v1844
        %1946 = vmatpush1.msra.mxu0 %v1843
        %1947 = vmatprep.subr.mxu0 %v1846
        %1948 = vmatpush1.msra.mxu0 %v1845
        %1949 = vmatprep.subr.mxu0 %v1848
        %1950 = vmatpush1.msra.mxu0 %v1847
        %1951 = vmatprep.subr.mxu0 %v1850
        %1952 = vmatpush1.msra.mxu0 %v1849
        %1953 = vmatprep.subr.mxu0 %v1852
        %1954 = vmatpush1.msra.mxu0 %v1851
        %1955 = vmatprep.subr.mxu0 %v1854
        %1956 = vmatpush1.msra.mxu0 %v1853
        %1957 = vmatprep.subr.mxu0 %v1856
        %1958 = vmatpush1.msra.mxu0 %v1855
        %1959 = vmatprep.subr.mxu0 %v1858
        %1960 = vmatpush1.msra.mxu0 %v1857
        %1961 = vmatprep.subr.mxu0 %v1860
        %1962 = vmatpush1.msra.mxu0 %v1859
        %1963 = vmatprep.subr.mxu0 %v1862
        %1964 = vmatpush1.msra.mxu0 %v1861
        %1965 = vmatprep.subr.mxu0 %v1864
        %1966 = vmatpush1.msra.mxu0 %v1863
        %1967 = vmatprep.subr.mxu0 %v1866
        %1968 = vmatpush1.msra.mxu0 %v1865
        %1969 = vmatprep.subr.mxu0 %v1868
        %1970 = vmatpush1.msra.mxu0 %v1867
        %1971 = vmatprep.subr.mxu0 %v1870
        %1972 = vmatpush1.msra.mxu0 %v1869
        %1973 = vmatprep.subr.mxu0 %v1872
        %1974 = vmatpush1.msra.mxu0 %v1871
        %1975 = vmatprep.subr.mxu0 %v1874
        %1976 = vmatpush1.msra.mxu0 %v1873
        %1977 = vmatprep.subr.mxu0 %v1876
        %1978 = vmatpush1.msra.mxu0 %v1875
        %1979 = vmatprep.subr.mxu0 %v1878
        %1980 = vmatpush1.msra.mxu0 %v1877
        %1981 = vmatprep.subr.mxu0 %v1880
        %1982 = vmatpush1.msra.mxu0 %v1879
        %1983 = vmatprep.subr.mxu0 %v1882
        %1984 = vmatpush1.msra.mxu0 %v1881
        %1985 = vmatprep.subr.mxu0 %v1884
        %1986 = vmatpush1.msra.mxu0 %v1883
        %1987 = vmatprep.subr.mxu0 %v1886
        %1988 = vmatpush1.msra.mxu0 %v1885
        %1989 = vmatprep.mubr.f32.mxu0 %v1913
        %1990 = vmatmul.mubr.f32.gmra.mrb[0].mxu0 %v1910
        %v1991 = vpop.f32.mrb[0].mxu0
        %v1992 = vadd.f32 0.0, %v1991
        %v1993 = vpop.f32.mrb[0].mxu0
        %v1994 = vadd.f32 0.0, %v1993
        %1995 = vmatprep.mubr.f32.mxu0 %v1912
        %1996 = vmatmul.mubr.f32.gmra.mrb[0].mxu0 %v1909
        %v1997 = vpop.f32.mrb[0].mxu0
        %v1998 = vadd.f32 0.0, %v1997
        %v1999 = vpop.f32.mrb[0].mxu0
        %v2000 = vadd.f32 0.0, %v1999
        %2001 = vdwg.mxu0
        %2002 = vmatprep.subr.mxu0 %v1888
        %2003 = vmatpush1.msra.mxu0 %v1887
        %2004 = vmatprep.subr.mxu0 %v1890
        %2005 = vmatpush1.msra.mxu0 %v1889
        %2006 = vmatprep.subr.mxu0 %v1892
        %2007 = vmatpush1.msra.mxu0 %v1891
        %2008 = vmatprep.subr.mxu0 %v1894
        %2009 = vmatpush1.msra.mxu0 %v1893
        %2010 = vmatprep.subr.mxu0 %v1896
        %2011 = vmatpush1.msra.mxu0 %v1895
        %2012 = vmatprep.subr.mxu0 %v1898
        %2013 = vmatpush1.msra.mxu0 %v1897
        %2014 = vmatprep.subr.mxu0 %v1900
        %2015 = vmatpush1.msra.mxu0 %v1899
        %2016 = vmatprep.subr.mxu0 %v1902
        %2017 = vmatpush1.msra.mxu0 %v1901
        %2018 = vmatprep.subr.mxu0 0.0
        %2019 = vmatpush1.msra.mxu0 0.0
        %2020 = vmatprep.subr.mxu0 0.0
        %2021 = vmatpush1.msra.mxu0 0.0
        %2022 = vmatprep.subr.mxu0 0.0
        %2023 = vmatpush1.msra.mxu0 0.0
        %2024 = vmatprep.subr.mxu0 0.0
        %2025 = vmatpush1.msra.mxu0 0.0
        %2026 = vmatprep.subr.mxu0 0.0
        %2027 = vmatpush1.msra.mxu0 0.0
        %2028 = vmatprep.subr.mxu0 0.0
        %2029 = vmatpush1.msra.mxu0 0.0
        %2030 = vmatprep.subr.mxu0 0.0
        %2031 = vmatpush1.msra.mxu0 0.0
        %2032 = vmatprep.subr.mxu0 0.0
        %2033 = vmatpush1.msra.mxu0 0.0
        %2034 = vmatprep.subr.mxu0 0.0
        %2035 = vmatpush1.msra.mxu0 0.0
        %2036 = vmatprep.subr.mxu0 0.0
        %2037 = vmatpush1.msra.mxu0 0.0
        %2038 = vmatprep.subr.mxu0 0.0
        %2039 = vmatpush1.msra.mxu0 0.0
        %2040 = vmatprep.subr.mxu0 0.0
        %2041 = vmatpush1.msra.mxu0 0.0
        %2042 = vmatprep.subr.mxu0 0.0
        %2043 = vmatpush1.msra.mxu0 0.0
        %2044 = vmatprep.subr.mxu0 0.0
        %2045 = vmatpush1.msra.mxu0 0.0
        %2046 = vmatprep.subr.mxu0 0.0
        %2047 = vmatpush1.msra.mxu0 0.0
        %2048 = vmatprep.subr.mxu0 0.0
        %2049 = vmatpush1.msra.mxu0 0.0
        %2050 = vmatprep.subr.mxu0 0.0
        %2051 = vmatpush1.msra.mxu0 0.0
        %2052 = vmatprep.subr.mxu0 0.0
        %2053 = vmatpush1.msra.mxu0 0.0
        %2054 = vmatprep.subr.mxu0 0.0
        %2055 = vmatpush1.msra.mxu0 0.0
        %2056 = vmatprep.subr.mxu0 0.0
        %2057 = vmatpush1.msra.mxu0 0.0
        %2058 = vmatprep.subr.mxu0 0.0
        %2059 = vmatpush1.msra.mxu0 0.0
        %2060 = vmatprep.subr.mxu0 0.0
        %2061 = vmatpush1.msra.mxu0 0.0
        %2062 = vmatprep.subr.mxu0 0.0
        %2063 = vmatpush1.msra.mxu0 0.0
        %2064 = vmatprep.subr.mxu0 0.0
        %2065 = vmatpush1.msra.mxu0 0.0
        %2066 = vmatprep.mubr.f32.mxu0 0.0
        %2067 = vmatmul.mubr.f32.gmra.mrb[0].mxu0 %v1921
        %v2068 = vpop.f32.mrb[0].mxu0
        %v2069 = vadd.f32 %v1992, %v2068
        %v2070 = vpop.f32.mrb[0].mxu0
        %v2071 = vadd.f32 %v1994, %v2070
        %2072 = vmatprep.mubr.f32.mxu0 0.0
        %2073 = vmatmul.mubr.f32.gmra.mrb[0].mxu0 %v1923
        %v2074 = vpop.f32.mrb[0].mxu0
        %v2075 = vadd.f32 %v1998, %v2074
        %v2076 = vpop.f32.mrb[0].mxu0
        %v2077 = vadd.f32 %v2000, %v2076
        %2078 = vdwg.mxu0
        %v2079 = vadd.f32 %v1812, %v2069
        %v2080 = vadd.f32 %v1814, %v2071
        %v2081 = vadd.f32 %v1818, %v2075
        %v2082 = vadd.f32 %v1820, %v2077
        %v2083 = vld [vmem:[%s5] sm:$0x3]
        %v2085 = vlaneseq
        %v2086 = vshrl.u32 %v2085, 7
        %v2087 = vsub.s32 0, %v2086
        %v2088 = vrot.slane %v2083, %v2087
        %v2089 = vlaneseq
        %v2090 = vshrl.u32 %v2089, 7
        %v2091 = vsub.s32 1, %v2090
        %v2092 = vrot.slane %v2083, %v2091
        %v2095 = vadd.f32 %v2079, %v2088
        %v2096 = vadd.f32 %v2080, %v2092
        %v2097 = vadd.f32 %v2081, %v2088
        %v2098 = vadd.f32 %v2082, %v2092
        %v2099 = vmax.f32 %v2095, 0.0
        %v2100 = vmax.f32 %v2096, 0.0
        %v2101 = vmax.f32 %v2097, 0.0
        %v2102 = vmax.f32 %v2098, 0.0
        %v2103 = vld [vmem:[%s3] sm:$0xff]
        %v2104 = vld [vmem:[%s3 + $0x8] sm:$0xff]
        %v2105 = vld [vmem:[%s3 + $0x10] sm:$0xff]
        %v2106 = vld [vmem:[%s3 + $0x18] sm:$0xff]
        %v2107 = vld [vmem:[%s3 + $0x20] sm:$0xff]
        %v2108 = vld [vmem:[%s3 + $0x28] sm:$0xff]
        %v2109 = vld [vmem:[%s3 + $0x30] sm:$0xff]
        %v2110 = vld [vmem:[%s3 + $0x38] sm:$0xff]
        %v2111 = vld [vmem:[%s3 + $0x40] sm:$0xff]
        %v2112 = vld [vmem:[%s3 + $0x48] sm:$0xff]
        %v2113 = vld [vmem:[%s3 + $0x50] sm:$0xff]
        %v2114 = vld [vmem:[%s3 + $0x58] sm:$0xff]
        %v2115 = vld [vmem:[%s3 + $0x60] sm:$0xff]
        %v2116 = vld [vmem:[%s3 + $0x68] sm:$0xff]
        %v2117 = vld [vmem:[%s3 + $0x70] sm:$0xff]
        %v2118 = vld [vmem:[%s3 + $0x78] sm:$0xff]
        %v2119 = vld [vmem:[%s3 + $0x80] sm:$0xff]
        %v2120 = vld [vmem:[%s3 + $0x88] sm:$0xff]
        %v2121 = vld [vmem:[%s3 + $0x90] sm:$0xff]
        %v2122 = vld [vmem:[%s3 + $0x98] sm:$0xff]
        %v2123 = vld [vmem:[%s3 + $0xa0] sm:$0xff]
        %v2124 = vld [vmem:[%s3 + $0xa8] sm:$0xff]
        %v2125 = vld [vmem:[%s3 + $0xb0] sm:$0xff]
        %v2126 = vld [vmem:[%s3 + $0xb8] sm:$0xff]
        %v2127 = vld [vmem:[%s3 + $0xc0] sm:$0xff]
        %v2128 = vld [vmem:[%s3 + $0xc8] sm:$0xff]
        %v2129 = vld [vmem:[%s3 + $0xd0] sm:$0xff]
        %v2130 = vld [vmem:[%s3 + $0xd8] sm:$0xff]
        %v2131 = vld [vmem:[%s3 + $0xe0] sm:$0xff]
        %v2132 = vld [vmem:[%s3 + $0xe8] sm:$0xff]
        %v2133 = vld [vmem:[%s3 + $0xf0] sm:$0xff]
        %v2134 = vld [vmem:[%s3 + $0xf8] sm:$0xff]
        %v2135 = vld [vmem:[%s6] sm:$0x1]
        %v2137 = vlaneseq
        %v2138 = vshrl.u32 %v2137, 7
        %v2139 = vsub.s32 0, %v2138
        %v2140 = vrot.slane %v2135, %v2139
        %2142 = vmatprep.subr.mxu0 0.0
        %2143 = vmatpush1.msra.mxu0 %v2103
        %2144 = vmatprep.subr.mxu0 0.0
        %2145 = vmatpush1.msra.mxu0 %v2104
        %2146 = vmatprep.subr.mxu0 0.0
        %2147 = vmatpush1.msra.mxu0 %v2105
        %2148 = vmatprep.subr.mxu0 0.0
        %2149 = vmatpush1.msra.mxu0 %v2106
        %2150 = vmatprep.subr.mxu0 0.0
        %2151 = vmatpush1.msra.mxu0 %v2107
        %2152 = vmatprep.subr.mxu0 0.0
        %2153 = vmatpush1.msra.mxu0 %v2108
        %2154 = vmatprep.subr.mxu0 0.0
        %2155 = vmatpush1.msra.mxu0 %v2109
        %2156 = vmatprep.subr.mxu0 0.0
        %2157 = vmatpush1.msra.mxu0 %v2110
        %2158 = vmatprep.subr.mxu0 0.0
        %2159 = vmatpush1.msra.mxu0 %v2111
        %2160 = vmatprep.subr.mxu0 0.0
        %2161 = vmatpush1.msra.mxu0 %v2112
        %2162 = vmatprep.subr.mxu0 0.0
        %2163 = vmatpush1.msra.mxu0 %v2113
        %2164 = vmatprep.subr.mxu0 0.0
        %2165 = vmatpush1.msra.mxu0 %v2114
        %2166 = vmatprep.subr.mxu0 0.0
        %2167 = vmatpush1.msra.mxu0 %v2115
        %2168 = vmatprep.subr.mxu0 0.0
        %2169 = vmatpush1.msra.mxu0 %v2116
        %2170 = vmatprep.subr.mxu0 0.0
        %2171 = vmatpush1.msra.mxu0 %v2117
        %2172 = vmatprep.subr.mxu0 0.0
        %2173 = vmatpush1.msra.mxu0 %v2118
        %2174 = vmatprep.subr.mxu0 0.0
        %2175 = vmatpush1.msra.mxu0 %v2119
        %2176 = vmatprep.subr.mxu0 0.0
        %2177 = vmatpush1.msra.mxu0 %v2120
        %2178 = vmatprep.subr.mxu0 0.0
        %2179 = vmatpush1.msra.mxu0 %v2121
        %2180 = vmatprep.subr.mxu0 0.0
        %2181 = vmatpush1.msra.mxu0 %v2122
        %2182 = vmatprep.subr.mxu0 0.0
        %2183 = vmatpush1.msra.mxu0 %v2123
        %2184 = vmatprep.subr.mxu0 0.0
        %2185 = vmatpush1.msra.mxu0 %v2124
        %2186 = vmatprep.subr.mxu0 0.0
        %2187 = vmatpush1.msra.mxu0 %v2125
        %2188 = vmatprep.subr.mxu0 0.0
        %2189 = vmatpush1.msra.mxu0 %v2126
        %2190 = vmatprep.subr.mxu0 0.0
        %2191 = vmatpush1.msra.mxu0 %v2127
        %2192 = vmatprep.subr.mxu0 0.0
        %2193 = vmatpush1.msra.mxu0 %v2128
        %2194 = vmatprep.subr.mxu0 0.0
        %2195 = vmatpush1.msra.mxu0 %v2129
        %2196 = vmatprep.subr.mxu0 0.0
        %2197 = vmatpush1.msra.mxu0 %v2130
        %2198 = vmatprep.subr.mxu0 0.0
        %2199 = vmatpush1.msra.mxu0 %v2131
        %2200 = vmatprep.subr.mxu0 0.0
        %2201 = vmatpush1.msra.mxu0 %v2132
        %2202 = vmatprep.subr.mxu0 0.0
        %2203 = vmatpush1.msra.mxu0 %v2133
        %2204 = vmatprep.subr.mxu0 0.0
        %2205 = vmatpush1.msra.mxu0 %v2134
        %2206 = vmatprep.mubr.f32.mxu0 %v2100
        %2207 = vmatmul.mubr.f32.gmra.mrb[0].mxu0 %v2099
        %v2208 = vpop.f32.mrb[0].mxu0
        %v2209 = vadd.f32 %v2140, %v2208
        %v2210 = vpop.f32.mrb[0].mxu0
        %2211 = vmatprep.mubr.f32.mxu0 %v2102
        %2212 = vmatmul.mubr.f32.gmra.mrb[0].mxu0 %v2101
        %v2213 = vpop.f32.mrb[0].mxu0
        %v2214 = vadd.f32 %v2140, %v2213
        %v2215 = vpop.f32.mrb[0].mxu0
        %2216 = vdwg.mxu0
        %vm2217 = vcmask 261120
        %2218 = vst.msk [vmem:[%s293] sm:$0xff] %vm2217, %v2209
        %vm2219 = vcmask 257024
        %2220 = vst.msk [vmem:[%s293 + $0x8] sm:$0xf] %vm2219, %v2214
        %p2221 = scmp.lt.s32.totalorder %s19, 1
        %s2222 = scalar_select %p2221, %s19, 1
        %s2223 = smul.addr %s2222, 2
        %s2224 = smul.addr %s2223, 8
        %s2225 = scalar_lea.vmem %s7, %s2224
        // Predicated region
        $region53: #{tpu_custom_call.1} parent=47 // pred_check
          %p2226 = pneg %p189
        $region54: #{tpu_custom_call.1} parent=47 // pred_check_branch
          %2228 = sbr.rel (%p2226) target = $region56
        $region55: #{tpu_custom_call.1} parent=47 // pred_region
          _
        $region56: #{tpu_custom_call.1} parent=47 // pred_fallthru
          _
      $region48: #{tpu_custom_call.1} parent=5 // pred_fallthru
        _
      %p2229 = scmp.le.s32.totalorder 2, %s14
      // Predicated region
      $region57: #{tpu_custom_call.1} parent=5 // pred_check
        %p2230 = pneg %p2229
      $region58: #{tpu_custom_call.1} parent=5 // pred_check_branch
        %2232 = sbr.rel (%p2230) target = $region60
      $region59: #{tpu_custom_call.1} parent=5 // pred_region
        %s2233 = ssub.s32 %s14, 2
        // Predicated region
        $region61: #{tpu_custom_call.1} parent=59 // pred_check
          %p2234 = pneg %p195
        $region62: #{tpu_custom_call.1} parent=59 // pred_check_branch
          %2236 = sbr.rel (%p2234) target = $region64
        $region63: #{tpu_custom_call.1} parent=59 // pred_region
          %p2237 = scmp.lt.s32.totalorder %s20, 1
          %s2238 = scalar_select %p2237, %s20, 1
          %s2239 = smul.addr %s2238, 2
          %s2240 = smul.addr %s2239, 8
          %s2241 = scalar_lea.vmem %s7, %s2240
        $region64: #{tpu_custom_call.1} parent=59 // pred_fallthru
          _
      $region60: #{tpu_custom_call.1} parent=5 // pred_fallthru
        _
    $region6: #{tpu_custom_call.1} parent=1 // loop_footer
      %s18 = sadd.s32 1, %s14
    $region7: #{tpu_custom_call.1} parent=1 // loop_footer_branch
      %13 = sbr.rel target = $region3
    $region8: #{tpu_custom_call.1} parent=1 // loop_exit
      _
    %2242 = vsyncpa [#allocation3], 1
    %s2243 = scalar_lea.sflag [#allocation3], 1
    %2244 = vsyncpa %s2243, 1

</llo_original>
